<compile_context>
chip_gen: v6e
topology: v6e:2x2x1
jax: 0.10.0
libtpu: 0.0.40
codegen_flags: <defaults>
</compile_context>

<pallas_src>
import functools
import math

import jax
import jax.numpy as jnp
import numpy as np
from jax.experimental import pallas as pl
from jax.experimental.pallas import tpu as pltpu


def _round_up(x, m):
    return ((x + m - 1) // m) * m


def _vmem_budget_and_limit():
    """Derive a tile-sizing VMEM budget and the scoped limit per generation."""
    try:
        cap = int(pltpu.get_tpu_info().vmem_capacity_bytes)
    except Exception:
        cap = 64 * 1024 * 1024  # conservative (v7x-like) fallback
    if cap <= 64 * 1024 * 1024:
        limit = 48 * 1024 * 1024   # v7x: stay well inside 64 MiB physical VMEM
    else:
        limit = 96 * 1024 * 1024   # v5e / v6e: 128 MiB physical VMEM
    budget = int(limit * 0.75)     # headroom for compiler-internal scratch
    return budget, limit


def _choose_tile_n(n, c, in_itemsize, budget_bytes, max_rows=8192):
    """Rows per tile: as large as the real double-buffered working set allows.

    Per-row footprint:
      * 2 logits inputs x 2 pipeline buffers x C_pad x itemsize (DMA blocks)
      * packed (tile_n, 2) int32 targets, lane-padded to 128, x 2 buffers
      * ~8 f32 in-kernel temporaries of width C_pad (x, z, exp, iota, w, wz, ...)
      * (tile_n, 1) f32 accumulator, lane-padded to 128
    """
    c_pad = _round_up(c, 128)
    per_row = (2 * 2 * c_pad * in_itemsize
               + 2 * 128 * 4
               + 8 * c_pad * 4
               + 128 * 4)
    rows_by_budget = max(8, budget_bytes // per_row)
    tile = min(max_rows, rows_by_budget, _round_up(n, 8))
    return max(8, (int(tile) // 8) * 8)


def _pad_rows(x, n_pad):
    n = x.shape[0]
    if n_pad == n:
        return x
    return jnp.pad(x, ((0, n_pad - n), (0, 0)))


def _nmt_kl_kernel(ls_ref, le_ref, tgt_ref, out_ref, acc_ref, *,
                   conf, eps, ent_const, use_mxu):
    i = pl.program_id(1)

    # Resident VMEM accumulator: init once per core, accumulate every tile.
    @pl.when(i == 0)
    def _():
        acc_ref[...] = jnp.zeros_like(acc_ref)

    def per_row_kl(logits_ref, tgt_col):
        x = logits_ref[...].astype(jnp.float32)                 # (tile_n, C)

        # nn.LogSoftmax(dim=1) over the class (lane) axis, folded with the KL:
        #   per_row = sum_c t*log t - sum_c t*lp
        #           = ent_const - (sum_c w*z - lse)        (since sum_c w == 1)
        m = jnp.max(x, axis=-1, keepdims=True)                  # XLU
        z = x - m
        p = jnp.exp(z)                                          # EUP
        lane = jax.lax.broadcasted_iota(jnp.int32, x.shape, 1)
        w = jnp.where(lane == tgt_col, jnp.float32(conf), jnp.float32(eps))
        wz = w * z

        if use_mxu:
            # Lane sums on the otherwise-idle MXU (ones-vector matmuls).
            ones = jnp.ones((x.shape[-1], 1), jnp.float32)
            s1 = jnp.dot(p, ones, precision=jax.lax.Precision.HIGHEST,
                         preferred_element_type=jnp.float32)    # sum exp(z)
            s2 = jnp.dot(wz, ones, precision=jax.lax.Precision.HIGHEST,
                         preferred_element_type=jnp.float32)    # sum w*z
        else:
            # C not a multiple of 128: keep masked lane reductions on VPU/XLU.
            s1 = jnp.sum(p, axis=-1, keepdims=True)
            s2 = jnp.sum(wz, axis=-1, keepdims=True)

        lse = jnp.log(s1)
        return jnp.float32(ent_const) + lse - s2                # (tile_n, 1)

    ts = tgt_ref[:, 0:1]   # start target index (column 0)
    te = tgt_ref[:, 1:2]   # end target index   (column 1)
    acc_ref[...] += per_row_kl(ls_ref, ts) + per_row_kl(le_ref, te)

    # Single cross-sublane reduce + output store, once per core.
    @pl.when(i == pl.num_programs(1) - 1)
    def _():
        total = jnp.sum(acc_ref[...])
        out_ref[...] = jnp.broadcast_to(total, out_ref.shape)


def nmt_criterion_forward(output_s, output_e, target_s, target_e,
                          label_smoothing=0.1, tile_n=None):
    """Forward pass of NMTCritierion.

    output_s, output_e: (B, J, C) float logits (per-joint start / end scores).
    target_s, target_e: (B, J, 2) int indices; start uses column 0 of
    target_s, end uses column 1 of target_e (as in the torch forward loop).
    Returns: scalar loss = sum over joints/rows of KLDiv(smoothed) / B.
    """
    assert label_smoothing > 0.0

    B, J, C = output_s.shape
    N = B * J
    ls = output_s.reshape(N, C)
    le = output_e.reshape(N, C)
    # Pack both target streams into one (N, 2) int32 array (single DMA stream).
    tgt = jnp.stack([target_s[:, :, 0].reshape(N),
                     target_e[:, :, 1].reshape(N)], axis=-1).astype(jnp.int32)

    in_itemsize = jnp.dtype(output_s.dtype).itemsize
    budget, vmem_limit = _vmem_budget_and_limit()
    if tile_n is None:
        tile_n = _choose_tile_n(N, C, in_itemsize, budget)
    tile_n = max(8, (int(tile_n) // 8) * 8)

    n_tiles = -(-N // tile_n)
    n_split = 2 if n_tiles >= 2 else 1      # both v7x TCs; harmless on 1-TC chips
    tiles_per_core = -(-n_tiles // n_split)
    n_pad = tile_n * tiles_per_core * n_split

    ls = _pad_rows(ls, n_pad)
    le = _pad_rows(le, n_pad)
    tgt = _pad_rows(tgt, n_pad)

    eps = label_smoothing / (C - 1)
    conf = 1.0 - label_smoothing
    ent_const = conf * math.log(conf) + (C - 1) * eps * math.log(eps)
    use_mxu = (C % 128 == 0)

    kernel = functools.partial(_nmt_kl_kernel, conf=conf, eps=eps,
                               ent_const=ent_const, use_mxu=use_mxu)

    partials = pl.pallas_call(
        kernel,
        out_shape=jax.ShapeDtypeStruct((n_split, 8, 128), jnp.float32),
        grid=(n_split, tiles_per_core),
        in_specs=[
            pl.BlockSpec((tile_n, C), lambda p, i: (p * tiles_per_core + i, 0)),
            pl.BlockSpec((tile_n, C), lambda p, i: (p * tiles_per_core + i, 0)),
            pl.BlockSpec((tile_n, 2), lambda p, i: (p * tiles_per_core + i, 0)),
        ],
        out_specs=pl.BlockSpec((1, 8, 128), lambda p, i: (p, 0, 0)),
        scratch_shapes=[pltpu.VMEM((tile_n, 1), jnp.float32)],
        compiler_params=pltpu.CompilerParams(
            dimension_semantics=("parallel", "arbitrary"),
            vmem_limit_bytes=vmem_limit),
    )(ls, le, tgt)

    total = jnp.sum(partials[:, 0, 0])

    # Zero-padded rows (zero logits, target index 0) each contribute exactly
    # ent_const + log(C) per pass; subtract their analytic contribution
    # instead of masking inside the kernel.
    pad_rows = n_pad - N
    if pad_rows:
        total = total - 2.0 * pad_rows * (ent_const + math.log(C))
    return total / B


def _reference_forward(output_s, output_e, target_s, target_e, label_smoothing):
    """Pure-JAX reference mirroring the torch semantics (for verification)."""
    B, J, C = output_s.shape
    N = B * J
    eps = label_smoothing / (C - 1)
    conf = 1.0 - label_smoothing

    def per(logits, tgt):
        lp = jax.nn.log_softmax(logits.astype(jnp.float32), axis=-1)
        t = jnp.full(logits.shape, eps, jnp.float32)
        t = t.at[jnp.arange(logits.shape[0]), tgt].set(conf)
        return jnp.sum(t * (jnp.log(t) - lp))

    loss = (per(output_s.reshape(N, C), target_s[:, :, 0].reshape(N))
            + per(output_e.reshape(N, C), target_e[:, :, 1].reshape(N)))
    return loss / B


if __name__ == "__main__":
    label_smoothing = 0.1

    # Case 1: C multiple of 128 (MXU lane-sum path).
    B, J, C = 3, 5, 128
    k1, k2, k3, k4 = jax.random.split(jax.random.PRNGKey(0), 4)
    output_s = jax.random.normal(k1, (B, J, C), jnp.float32)
    output_e = jax.random.normal(k2, (B, J, C), jnp.float32)
    target_s = jax.random.randint(k3, (B, J, 2), 0, C, jnp.int32)
    target_e = jax.random.randint(k4, (B, J, 2), 0, C, jnp.int32)
    ref = _reference_forward(output_s, output_e, target_s, target_e,
                             label_smoothing)

    # Forced small tile: N=15 rows -> grid (2, 1) with the 2-way parallel split,
    # exercising the VMEM accumulator init/finalize and the pad correction.
    loss_tiled = jax.block_until_ready(nmt_criterion_forward(
        output_s, output_e, target_s, target_e, label_smoothing, tile_n=8))
    assert np.allclose(np.asarray(loss_tiled), np.asarray(ref),
                       rtol=1e-4, atol=1e-3), (loss_tiled, ref)

    # Default (auto) tile size path.
    loss_auto = jax.block_until_ready(nmt_criterion_forward(
        output_s, output_e, target_s, target_e, label_smoothing))
    assert np.allclose(np.asarray(loss_auto), np.asarray(ref),
                       rtol=1e-4, atol=1e-3), (loss_auto, ref)

    # Case 2: bf16 logits (native-dtype DMA, f32 math inside the kernel).
    loss_bf16 = jax.block_until_ready(nmt_criterion_forward(
        output_s.astype(jnp.bfloat16), output_e.astype(jnp.bfloat16),
        target_s, target_e, label_smoothing))
    ref_bf16 = _reference_forward(output_s.astype(jnp.bfloat16),
                                  output_e.astype(jnp.bfloat16),
                                  target_s, target_e, label_smoothing)
    assert np.allclose(np.asarray(loss_bf16), np.asarray(ref_bf16),
                       rtol=1e-4, atol=1e-3), (loss_bf16, ref_bf16)

    # Case 3: C not a multiple of 128 (VPU/XLU lane-sum fallback, padded lanes).
    B2, J2, C2 = 2, 3, 100
    q1, q2, q3, q4 = jax.random.split(jax.random.PRNGKey(1), 4)
    os2 = jax.random.normal(q1, (B2, J2, C2), jnp.float32)
    oe2 = jax.random.normal(q2, (B2, J2, C2), jnp.float32)
    ts2 = jax.random.randint(q3, (B2, J2, 2), 0, C2, jnp.int32)
    te2 = jax.random.randint(q4, (B2, J2, 2), 0, C2, jnp.int32)
    ref2 = _reference_forward(os2, oe2, ts2, te2, label_smoothing)
    loss2 = jax.block_until_ready(nmt_criterion_forward(
        os2, oe2, ts2, te2, label_smoothing))
    assert np.allclose(np.asarray(loss2), np.asarray(ref2),
                       rtol=1e-4, atol=1e-3), (loss2, ref2)

    print("KERNEL_OK")
</pallas_src>

<mosaic_0001>
module attributes {stable_mosaic.version = 11 : i64} {
  func.func @_nmt_kl_kernel(%arg0: i32, %arg1: i32, %arg2: memref<8x128xf32, #tpu.memory_space<vmem>>, %arg3: memref<8x128xf32, #tpu.memory_space<vmem>>, %arg4: memref<8x2xi32, #tpu.memory_space<vmem>>, %arg5: memref<1x8x128xf32, #tpu.memory_space<vmem>>, %arg6: memref<8x1xf32, #tpu.memory_space<vmem>>) attributes {dimension_semantics = [#tpu.dimension_semantics<parallel>, #tpu.dimension_semantics<arbitrary>], iteration_bounds = array<i64: 2, 1>, scalar_prefetch = 0 : i64, scratch_operands = 1 : i64, tpu.core_type = #tpu.core_type<tc>, window_params = [{transform_indices = @transform_0, window_bounds = array<i64: 8, 128>}, {transform_indices = @transform_1, window_bounds = array<i64: 8, 128>}, {transform_indices = @transform_2, window_bounds = array<i64: 8, 2>}, {transform_indices = @transform_3, window_bounds = array<i64: 1, 8, 128>}]} {
    %c0_i32 = arith.constant 0 : i32
    %0 = arith.cmpi eq, %arg1, %c0_i32 : i32
    %1 = arith.extui %0 : i1 to i32
    %c0_i32_0 = arith.constant 0 : i32
    %2 = arith.cmpi ne, %1, %c0_i32_0 : i32
    scf.if %2 {
      %cst_26 = arith.constant 0.000000e+00 : f32
      %52 = vector.broadcast %cst_26 : f32 to vector<8x1xf32>
      %c0_27 = arith.constant 0 : index
      %c0_28 = arith.constant 0 : index
      %53 = vector.load %arg6[%c0_27, %c0_28] : memref<8x1xf32, #tpu.memory_space<vmem>>, vector<8x1xf32>
      tpu.vector_store %arg6[%c0_27, %c0_28], %52 {strides = array<i32>} : memref<8x1xf32, #tpu.memory_space<vmem>>, vector<8x1xf32>,
    } else {
    }
    %c0 = arith.constant 0 : index
    %c0_1 = arith.constant 0 : index
    %3 = vector.load %arg4[%c0, %c0_1] : memref<8x2xi32, #tpu.memory_space<vmem>>, vector<8x1xi32>
    %c0_2 = arith.constant 0 : index
    %c1 = arith.constant 1 : index
    %4 = vector.load %arg4[%c0_2, %c1] : memref<8x2xi32, #tpu.memory_space<vmem>>, vector<8x1xi32>
    %c0_3 = arith.constant 0 : index
    %c0_4 = arith.constant 0 : index
    %5 = vector.load %arg6[%c0_3, %c0_4] : memref<8x1xf32, #tpu.memory_space<vmem>>, vector<8x1xf32>
    %c0_5 = arith.constant 0 : index
    %c0_6 = arith.constant 0 : index
    %6 = vector.load %arg2[%c0_5, %c0_6] : memref<8x128xf32, #tpu.memory_space<vmem>>, vector<8x128xf32>
    %cst = arith.constant dense<0xFF800000> : vector<8xf32>
    %7 = vector.multi_reduction <maximumf>, %6, %cst [1] : vector<8x128xf32> to vector<8xf32>
    %8 = vector.shape_cast %7 : vector<8xf32> to vector<8x1xf32>
    %9 = vector.broadcast %8 : vector<8x1xf32> to vector<8x128xf32>
    %10 = arith.subf %6, %9 : vector<8x128xf32>
    %11 = math.exp %10 : vector<8x128xf32>
    %12 = tpu.iota {dimensions = array<i32: 1>} : vector<8x128xi32>
    %13 = vector.broadcast %3 : vector<8x1xi32> to vector<8x128xi32>
    %14 = arith.cmpi eq, %12, %13 : vector<8x128xi32>
    %cst_7 = arith.constant 0.899999976 : f32
    %cst_8 = arith.constant 7.87401571E-4 : f32
    %15 = vector.broadcast %cst_7 : f32 to vector<8x128xf32>
    %16 = vector.broadcast %cst_8 : f32 to vector<8x128xf32>
    %17 = arith.select %14, %15, %16 : vector<8x128xi1>, vector<8x128xf32>
    %18 = arith.mulf %17, %10 : vector<8x128xf32>
    %cst_9 = arith.constant 1.000000e+00 : f32
    %19 = vector.broadcast %cst_9 : f32 to vector<128x1xf32>
    %cst_10 = arith.constant dense<0.000000e+00> : vector<8x1xf32>
    %20 = tpu.matmul %11, %19, %cst_10 {dimension_numbers = #tpu.dot_dimension_numbers<[1], [0], [0], [1], [0, 0, 1, 1], [], []>, precision = #tpu.contract_precision<fp32>} : vector<8x128xf32>, vector<128x1xf32>, vector<8x1xf32> -> vector<8x1xf32>
    %cst_11 = arith.constant dense<0.000000e+00> : vector<8x1xf32>
    %21 = tpu.matmul %18, %19, %cst_11 {dimension_numbers = #tpu.dot_dimension_numbers<[1], [0], [0], [1], [0, 0, 1, 1], [], []>, precision = #tpu.contract_precision<fp32>} : vector<8x128xf32>, vector<128x1xf32>, vector<8x1xf32> -> vector<8x1xf32>
    %22 = math.log %20 : vector<8x1xf32>
    %cst_12 = arith.constant -0.809501707 : f32
    %23 = vector.broadcast %cst_12 : f32 to vector<8x1xf32>
    %24 = arith.addf %23, %22 : vector<8x1xf32>
    %25 = arith.subf %24, %21 : vector<8x1xf32>
    %c0_13 = arith.constant 0 : index
    %c0_14 = arith.constant 0 : index
    %26 = vector.load %arg3[%c0_13, %c0_14] : memref<8x128xf32, #tpu.memory_space<vmem>>, vector<8x128xf32>
    %cst_15 = arith.constant dense<0xFF800000> : vector<8xf32>
    %27 = vector.multi_reduction <maximumf>, %26, %cst_15 [1] : vector<8x128xf32> to vector<8xf32>
    %28 = vector.shape_cast %27 : vector<8xf32> to vector<8x1xf32>
    %29 = vector.broadcast %28 : vector<8x1xf32> to vector<8x128xf32>
    %30 = arith.subf %26, %29 : vector<8x128xf32>
    %31 = math.exp %30 : vector<8x128xf32>
    %32 = tpu.iota {dimensions = array<i32: 1>} : vector<8x128xi32>
    %33 = vector.broadcast %4 : vector<8x1xi32> to vector<8x128xi32>
    %34 = arith.cmpi eq, %32, %33 : vector<8x128xi32>
    %cst_16 = arith.constant 0.899999976 : f32
    %cst_17 = arith.constant 7.87401571E-4 : f32
    %35 = vector.broadcast %cst_16 : f32 to vector<8x128xf32>
    %36 = vector.broadcast %cst_17 : f32 to vector<8x128xf32>
    %37 = arith.select %34, %35, %36 : vector<8x128xi1>, vector<8x128xf32>
    %38 = arith.mulf %37, %30 : vector<8x128xf32>
    %cst_18 = arith.constant 1.000000e+00 : f32
    %39 = vector.broadcast %cst_18 : f32 to vector<128x1xf32>
    %cst_19 = arith.constant dense<0.000000e+00> : vector<8x1xf32>
    %40 = tpu.matmul %31, %39, %cst_19 {dimension_numbers = #tpu.dot_dimension_numbers<[1], [0], [0], [1], [0, 0, 1, 1], [], []>, precision = #tpu.contract_precision<fp32>} : vector<8x128xf32>, vector<128x1xf32>, vector<8x1xf32> -> vector<8x1xf32>
    %cst_20 = arith.constant dense<0.000000e+00> : vector<8x1xf32>
    %41 = tpu.matmul %38, %39, %cst_20 {dimension_numbers = #tpu.dot_dimension_numbers<[1], [0], [0], [1], [0, 0, 1, 1], [], []>, precision = #tpu.contract_precision<fp32>} : vector<8x128xf32>, vector<128x1xf32>, vector<8x1xf32> -> vector<8x1xf32>
    %42 = math.log %40 : vector<8x1xf32>
    %cst_21 = arith.constant -0.809501707 : f32
    %43 = vector.broadcast %cst_21 : f32 to vector<8x1xf32>
    %44 = arith.addf %43, %42 : vector<8x1xf32>
    %45 = arith.subf %44, %41 : vector<8x1xf32>
    %46 = arith.addf %25, %45 : vector<8x1xf32>
    %47 = arith.addf %5, %46 : vector<8x1xf32>
    %c0_22 = arith.constant 0 : index
    %c0_23 = arith.constant 0 : index
    %48 = vector.load %arg6[%c0_22, %c0_23] : memref<8x1xf32, #tpu.memory_space<vmem>>, vector<8x1xf32>
    tpu.vector_store %arg6[%c0_22, %c0_23], %47 {strides = array<i32>} : memref<8x1xf32, #tpu.memory_space<vmem>>, vector<8x1xf32>,
    %c0_i32_24 = arith.constant 0 : i32
    %49 = arith.cmpi eq, %arg1, %c0_i32_24 : i32
    %50 = arith.extui %49 : i1 to i32
    %c0_i32_25 = arith.constant 0 : i32
    %51 = arith.cmpi ne, %50, %c0_i32_25 : i32
    scf.if %51 {
      %c0_26 = arith.constant 0 : index
      %c0_27 = arith.constant 0 : index
      %52 = vector.load %arg6[%c0_26, %c0_27] : memref<8x1xf32, #tpu.memory_space<vmem>>, vector<8x1xf32>
      %53 = vector.shape_cast %52 : vector<8x1xf32> to vector<1x8x1xf32>
      %cst_28 = arith.constant dense<0.000000e+00> : vector<1xf32>
      %54 = vector.multi_reduction <add>, %53, %cst_28 [1, 2] : vector<1x8x1xf32> to vector<1xf32>
      %55 = vector.shape_cast %54 : vector<1xf32> to vector<1x1x1xf32>
      %56 = vector.extract %55[0, 0, 0] : f32 from vector<1x1x1xf32>
      %57 = vector.broadcast %56 : f32 to vector<1x8x128xf32>
      %c0_29 = arith.constant 0 : index
      %c0_30 = arith.constant 0 : index
      %c0_31 = arith.constant 0 : index
      %58 = vector.load %arg5[%c0_29, %c0_30, %c0_31] : memref<1x8x128xf32, #tpu.memory_space<vmem>>, vector<1x8x128xf32>
      tpu.vector_store %arg5[%c0_29, %c0_30, %c0_31], %57 {strides = array<i32>} : memref<1x8x128xf32, #tpu.memory_space<vmem>>, vector<1x8x128xf32>,
    } else {
    }
    return
  }
  func.func @transform_0(%arg0: i32, %arg1: i32) -> (i32, i32) {
    %c1_i32 = arith.constant 1 : i32
    %0 = arith.muli %arg0, %c1_i32 : i32
    %1 = arith.addi %0, %arg1 : i32
    %c0_i32 = arith.constant 0 : i32
    %c0_i32_0 = arith.constant 0 : i32
    return %1, %c0_i32 : i32, i32
  }
  func.func @transform_1(%arg0: i32, %arg1: i32) -> (i32, i32) {
    %c1_i32 = arith.constant 1 : i32
    %0 = arith.muli %arg0, %c1_i32 : i32
    %1 = arith.addi %0, %arg1 : i32
    %c0_i32 = arith.constant 0 : i32
    %c0_i32_0 = arith.constant 0 : i32
    return %1, %c0_i32 : i32, i32
  }
  func.func @transform_2(%arg0: i32, %arg1: i32) -> (i32, i32) {
    %c1_i32 = arith.constant 1 : i32
    %0 = arith.muli %arg0, %c1_i32 : i32
    %1 = arith.addi %0, %arg1 : i32
    %c0_i32 = arith.constant 0 : i32
    %c0_i32_0 = arith.constant 0 : i32
    return %1, %c0_i32 : i32, i32
  }
  func.func @transform_3(%arg0: i32, %arg1: i32) -> (i32, i32, i32) {
    %c0_i32 = arith.constant 0 : i32
    %c0_i32_0 = arith.constant 0 : i32
    %c0_i32_1 = arith.constant 0 : i32
    return %arg0, %c0_i32, %c0_i32_0 : i32, i32, i32
  }
}

</mosaic_0001>

<llo_original>
// kernel: tpu_custom_call.1
$region0: #{tpu_custom_call.1}
  #allocation0 [shape = 'u32[]', space=smem, size = 0x4, offset = 0x4, fixed_abs, tag = 'smem constant byte address 0x4 - core index']
  #allocation1 [shape = 'u32[144,128]{1,0:T(1,128)}', space=vmem, size = 0x12000, scoped, tag = 'internal scratch']
  #allocation2 [shape = 'f32[8,1]{1,0:T(8,128)}', space=vmem, size = 0x1000, scoped, tag = 'scratch operand']
  %s0 = inlined_call_operand.vmem [shape: f32[16,128], index: 0, kind: input, shape index: {}]
  %s1 = inlined_call_operand.hbm [shape: f32[16,128], index: 1, kind: input, shape index: {}]
  %s2 = inlined_call_operand.vmem [shape: s32[16,2], index: 2, kind: input, shape index: {}]
  %s3 = inlined_call_operand.hbm [shape: f32[2,8,128], index: 3, kind: output, shape index: {}]
  %s4 = sld [smem:[#allocation0]]
  $region57: #{tpu_custom_call.1} parent=0
    _
  %s6 = ssub.s32 1, %s4
  %s7 = scalar_select 0, %s6, %s4
  $region1: #{tpu_custom_call.1} parent=0
    #allocation3 [shape = 'u8[8192]{0}', space=vmem, size = 0x2000, scoped, tag = 'input window, operand 1']
    #allocation4 [shape = 's32[2]{0}', space=sflag, size = 0x8, scoped, tag = 'scoped memory for tpu_custom_call.1']
    #allocation5 [shape = 's32[2]{0}', space=sflag, size = 0x8, scoped, tag = 'scoped memory for tpu_custom_call.1']
    #allocation6 [shape = 'u8[8192]{0}', space=vmem, size = 0x2000, scoped, tag = 'output window, operand 0']
    %8 = vsyncpa [#allocation4], 0
    %s9 = scalar_lea.sflag [#allocation4], 1
    %10 = vsyncpa %s9, 0
    %11 = vsyncpa [#allocation5], 0
    %s12 = scalar_lea.sflag [#allocation5], 1
    %13 = vsyncpa %s12, 0
    loop: start=0, step=1, limit=4
    $region2: #{tpu_custom_call.1} parent=1 // loop_pre_header
      _
    $region3: #{tpu_custom_call.1} parent=1 // loop_header
      %s15 = sphi 0, %s19
      %p16 = scmp.ge.s32.totalorder %s15, 4
      %s22 = sphi 0, %s34
      %s23 = sphi 0, %s30
      %s24 = sphi 0, %s22
      %s25 = sphi 0, %s23
      %s26 = sphi 0, %s24
      %s27 = sphi 0, %s25
      %s39 = sphi 0, %s41
      %s42 = sphi 0, %s39
      %s43 = sphi 0, %s42
      %s59 = sphi 0, %s43
      %s67 = sphi 0, %s69
      %s70 = sphi 0, %s67
      %s71 = sphi 0, %s70
      %s87 = sphi 0, %s71
      %s95 = sphi 0, %s97
      %s98 = sphi 0, %s95
      %s99 = sphi 0, %s98
      %s115 = sphi 0, %s99
      %s121 = sphi 0, %s123
      %s124 = sphi 0, %s121
      %s125 = sphi 0, %s124
      %s141 = sphi 0, %s125
    $region4: #{tpu_custom_call.1} parent=1 // loop_header_branch
      %18 = sbr.rel (%p16) target = $region8
    $region5: #{tpu_custom_call.1} parent=1 // loop_body
      %s20 = ssub.s32 %s15, 1
      %s21 = ssub.s32 %s15, 2
      %s28 = sadd.s32 1, %s23
      %p29 = scmp.ge.s32.totalorder %s28, 1
      %s30 = scalar_select %p29, 0, %s28
      %s31 = sadd.s32 1, %s22
      %s32 = scalar_select %p29, %s31, %s22
      %p33 = scmp.ge.s32.totalorder %s32, 2
      %s34 = scalar_select %p33, 0, %s32
      %s35 = sadd.s32 %s22, %s23
      %s36 = sadd.s32 %s34, %s30
      %s37 = ssub.s32 %s35, %s36
      %p38 = scmp.eq.s32.totalorder %s37, 0
      %s40 = sadd.s32 %s39, 1
      %s41 = scalar_select %p38, %s39, %s40
      %p44 = pneg %p38
      %p45 = scmp.eq.s32.totalorder %s15, 1
      %p46 = por %p44, %p45
      %p47 = scmp.ne.s32.totalorder %s39, %s42
      %p48 = scmp.eq.s32.totalorder %s15, 0
      %p49 = por %p47, %p48
      %p50 = scmp.ne.s32.totalorder %s39, %s42
      %p51 = scmp.eq.s32.totalorder %s20, 1
      %p52 = por %p50, %p51
      %p53 = scmp.ne.s32.totalorder %s42, %s43
      %p54 = scmp.eq.s32.totalorder %s20, 0
      %p55 = por %p53, %p54
      %p56 = scmp.ne.s32.totalorder %s42, %s43
      %p57 = scmp.eq.s32.totalorder %s21, 1
      %p58 = por %p56, %p57
      %p60 = scmp.ne.s32.totalorder %s43, %s59
      %p61 = scmp.eq.s32.totalorder %s21, 0
      %p62 = por %p60, %p61
      %s63 = sadd.s32 %s22, %s23
      %s64 = sadd.s32 %s34, %s30
      %s65 = ssub.s32 %s63, %s64
      %p66 = scmp.eq.s32.totalorder %s65, 0
      %s68 = sadd.s32 %s67, 1
      %s69 = scalar_select %p66, %s67, %s68
      %p72 = pneg %p66
      %p73 = scmp.eq.s32.totalorder %s15, 1
      %p74 = por %p72, %p73
      %p75 = scmp.ne.s32.totalorder %s67, %s70
      %p76 = scmp.eq.s32.totalorder %s15, 0
      %p77 = por %p75, %p76
      %p78 = scmp.ne.s32.totalorder %s67, %s70
      %p79 = scmp.eq.s32.totalorder %s20, 1
      %p80 = por %p78, %p79
      %p81 = scmp.ne.s32.totalorder %s70, %s71
      %p82 = scmp.eq.s32.totalorder %s20, 0
      %p83 = por %p81, %p82
      %p84 = scmp.ne.s32.totalorder %s70, %s71
      %p85 = scmp.eq.s32.totalorder %s21, 1
      %p86 = por %p84, %p85
      %p88 = scmp.ne.s32.totalorder %s71, %s87
      %p89 = scmp.eq.s32.totalorder %s21, 0
      %p90 = por %p88, %p89
      %s91 = sadd.s32 %s22, %s23
      %s92 = sadd.s32 %s34, %s30
      %s93 = ssub.s32 %s91, %s92
      %p94 = scmp.eq.s32.totalorder %s93, 0
      %s96 = sadd.s32 %s95, 1
      %s97 = scalar_select %p94, %s95, %s96
      %p100 = pneg %p94
      %p101 = scmp.eq.s32.totalorder %s15, 1
      %p102 = por %p100, %p101
      %p103 = scmp.ne.s32.totalorder %s95, %s98
      %p104 = scmp.eq.s32.totalorder %s15, 0
      %p105 = por %p103, %p104
      %p106 = scmp.ne.s32.totalorder %s95, %s98
      %p107 = scmp.eq.s32.totalorder %s20, 1
      %p108 = por %p106, %p107
      %p109 = scmp.ne.s32.totalorder %s98, %s99
      %p110 = scmp.eq.s32.totalorder %s20, 0
      %p111 = por %p109, %p110
      %p112 = scmp.ne.s32.totalorder %s98, %s99
      %p113 = scmp.eq.s32.totalorder %s21, 1
      %p114 = por %p112, %p113
      %p116 = scmp.ne.s32.totalorder %s99, %s115
      %p117 = scmp.eq.s32.totalorder %s21, 0
      %p118 = por %p116, %p117
      %s119 = ssub.s32 %s22, %s34
      %p120 = scmp.eq.s32.totalorder %s119, 0
      %s122 = sadd.s32 %s121, 1
      %s123 = scalar_select %p120, %s121, %s122
      %p126 = pneg %p120
      %p127 = scmp.eq.s32.totalorder %s15, 1
      %p128 = por %p126, %p127
      %p129 = scmp.ne.s32.totalorder %s121, %s124
      %p130 = scmp.eq.s32.totalorder %s15, 0
      %p131 = por %p129, %p130
      %p132 = scmp.ne.s32.totalorder %s121, %s124
      %p133 = scmp.eq.s32.totalorder %s20, 1
      %p134 = por %p132, %p133
      %p135 = scmp.ne.s32.totalorder %s124, %s125
      %p136 = scmp.eq.s32.totalorder %s20, 0
      %p137 = por %p135, %p136
      %p138 = scmp.ne.s32.totalorder %s124, %s125
      %p139 = scmp.eq.s32.totalorder %s21, 1
      %p140 = por %p138, %p139
      %p142 = scmp.ne.s32.totalorder %s125, %s141
      %p143 = scmp.eq.s32.totalorder %s21, 0
      %p144 = por %p142, %p143
      %p145 = scmp.le.s32.totalorder 1, %s15
      %p146 = scmp.lt.s32.totalorder %s15, 3
      %p147 = pnand %p145, %p146
      %p148 = pneg %p147
      // Predicated region
      $region9: #{tpu_custom_call.1} parent=5 // pred_check
        _
      $region10: #{tpu_custom_call.1} parent=5 // pred_check_branch
        %150 = sbr.rel (%p147) target = $region12
      $region11: #{tpu_custom_call.1} parent=5 // pred_region
        %s151 = ssub.s32 %s15, 1
      $region12: #{tpu_custom_call.1} parent=5 // pred_fallthru
        _
      %p152 = scmp.lt.s32.totalorder %s15, 2
      // Predicated region
      $region13: #{tpu_custom_call.1} parent=5 // pred_check
        %p153 = pneg %p152
      $region14: #{tpu_custom_call.1} parent=5 // pred_check_branch
        %155 = sbr.rel (%p153) target = $region16
      $region15: #{tpu_custom_call.1} parent=5 // pred_region
        // Predicated region
        $region17: #{tpu_custom_call.1} parent=15 // pred_check
          %p156 = pneg %p49
        $region18: #{tpu_custom_call.1} parent=15 // pred_check_branch
          %158 = sbr.rel (%p156) target = $region20
        $region19: #{tpu_custom_call.1} parent=15 // pred_region
          %s159 = sadd.s32 %s22, %s23
          %p160 = scmp.lt.s32.totalorder %s159, 1
          %s161 = scalar_select %p160, %s159, 1
          %s162 = smul.addr %s161, 8
          %s163 = scalar_lea.vmem %s0, %s162
          %s164 = sadd.s32 %s22, %s23
        $region20: #{tpu_custom_call.1} parent=15 // pred_fallthru
          _
        // Predicated region
        $region21: #{tpu_custom_call.1} parent=15 // pred_check
          %p165 = pneg %p77
        $region22: #{tpu_custom_call.1} parent=15 // pred_check_branch
          %167 = sbr.rel (%p165) target = $region24
        $region23: #{tpu_custom_call.1} parent=15 // pred_region
          %s168 = sand.u32 %s67, 1
          %s169 = scalar_lea.sflag [#allocation4], %s168
          %s170 = sand.u32 %s67, 1
          %s171 = smul.addr %s170, 8
          %s172 = scalar_lea.vmem [#allocation3], %s171
          %s173 = sadd.s32 %s22, %s23
          %s175 = ssub.s32 128, 128
          %176 = vsyncadd %s169, %s175
          %s177 = smul.addr %s173, 128
          %s178 = scalar_lea.hbm %s1, %s177
          %s180 = sshll.u32 %s172, 4
          %s181 = int_to_ptr.vmem [resolvable:$true] %s180
          %183 = dma.hbm_to_vmem [thread:$0]  %s178, 128, %s181, %s169
        $region24: #{tpu_custom_call.1} parent=15 // pred_fallthru
          _
        // Predicated region
        $region25: #{tpu_custom_call.1} parent=15 // pred_check
          %p184 = pneg %p105
        $region26: #{tpu_custom_call.1} parent=15 // pred_check_branch
          %186 = sbr.rel (%p184) target = $region28
        $region27: #{tpu_custom_call.1} parent=15 // pred_region
          %s187 = sadd.s32 %s22, %s23
          %p188 = scmp.lt.s32.totalorder %s187, 1
          %s189 = scalar_select %p188, %s187, 1
          %s190 = smul.addr %s189, 8
          %s191 = scalar_lea.vmem %s2, %s190
          %s192 = sadd.s32 %s22, %s23
        $region28: #{tpu_custom_call.1} parent=15 // pred_fallthru
          _
      $region16: #{tpu_custom_call.1} parent=5 // pred_fallthru
        _
      %p193 = scmp.le.s32.totalorder 1, %s15
      %p194 = scmp.lt.s32.totalorder %s15, 3
      %p195 = pnand %p193, %p194
      %p196 = pneg %p195
      // Predicated region
      $region29: #{tpu_custom_call.1} parent=5 // pred_check
        _
      $region30: #{tpu_custom_call.1} parent=5 // pred_check_branch
        %198 = sbr.rel (%p195) target = $region32
      $region31: #{tpu_custom_call.1} parent=5 // pred_region
        %s199 = ssub.s32 %s15, 1
        %s200 = sand.u32 %s70, 1
        %s201 = scalar_lea.sflag [#allocation4], %s200
        %s202 = sand.u32 %s70, 1
        %s203 = smul.addr %s202, 8
        %s204 = scalar_lea.vmem [#allocation3], %s203
        // Predicated region
        $region33: #{tpu_custom_call.1} parent=31 // pred_check
          %p205 = pneg %p83
        $region34: #{tpu_custom_call.1} parent=31 // pred_check_branch
          %207 = sbr.rel (%p205) target = $region36
        $region35: #{tpu_custom_call.1} parent=31 // pred_region
          %208 = dma.done %s201, 128
        $region36: #{tpu_custom_call.1} parent=31 // pred_fallthru
          _
        %s209 = sadd.s32 %s24, %s25
        %p210 = scmp.lt.s32.totalorder %s209, 1
        %s211 = scalar_select %p210, %s209, 1
        %s212 = smul.addr %s211, 8
        %s213 = scalar_lea.vmem %s0, %s212
        %p214 = pneg %p55
        %p215 = pneg %p52
        %s216 = sand.u32 %s70, 1
        %s217 = scalar_lea.sflag [#allocation4], %s216
        %s218 = sand.u32 %s70, 1
        %s219 = smul.addr %s218, 8
        %s220 = scalar_lea.vmem [#allocation3], %s219
        %p221 = pneg %p83
        %p222 = pneg %p80
        %s223 = sadd.s32 %s24, %s25
        %p224 = scmp.lt.s32.totalorder %s223, 1
        %s225 = scalar_select %p224, %s223, 1
        %s226 = smul.addr %s225, 8
        %s227 = scalar_lea.vmem %s2, %s226
        %p228 = pneg %p111
        %p229 = pneg %p108
        %p230 = pneg %p137
        %p231 = pneg %p134
        %s232 = sand.u32 %s124, 1
        %s233 = scalar_lea.sflag [#allocation5], %s232
        %s234 = sand.u32 %s124, 1
        %s235 = smul.addr %s234, 8
        %s236 = scalar_lea.vmem [#allocation6], %s235
        %s237 = sadd.s32 %s24, %s25
        %p238 = scmp.lt.s32.totalorder %s237, 1
        %s239 = scalar_select %p238, %s237, 1
        %s240 = smul.addr %s239, 8
        %s241 = scalar_lea.vmem %s0, %s240
        %s242 = sadd.s32 %s24, %s25
        %s243 = sadd.s32 %s24, %s25
        %s244 = sadd.s32 %s24, %s25
        %p245 = scmp.lt.s32.totalorder %s244, 1
        %s246 = scalar_select %p245, %s244, 1
        %s247 = smul.addr %s246, 8
        %s248 = scalar_lea.vmem %s2, %s247
        %s249 = sadd.s32 %s24, %s25
        %p250 = scmp.eq.s32.totalorder %s25, 0
        // Predicated region
        $region37: #{tpu_custom_call.1} parent=31 // pred_check
          %p251 = pneg %p250
        $region38: #{tpu_custom_call.1} parent=31 // pred_check_branch
          %253 = sbr.rel (%p251) target = $region40
        $region39: #{tpu_custom_call.1} parent=31 // pred_region
          %vm254 = vcmask 7168
          %255 = vst.msk [vmem:[#allocation2] sm:$0xff] %vm254, 0.0
        $region40: #{tpu_custom_call.1} parent=31 // pred_fallthru
          _
        %v256 = vld [vmem:[%s248] sm:$0xff]
        %v257 = vld [vmem:[#allocation2] sm:$0xff]
        %v258 = vld [vmem:[%s241] sm:$0xff]
        %259 = vmax.xlane.f32.xlu0 %v258
        %v260 = vpop.xlane.xlu0 %259
        %v261 = vsub.f32 %v258, %v260
        %v262 = vmul.f32 %v261, 1.442695
        %v263 = vpow.pop %v262
        %v264 = vlaneseq
        %v265 = vand.u32 %v264, 127
        %266 = vset.pattern.permute.xlu0 0
        %267 = vperm.xlu0 %266, %v256
        %v268 = vpop.permute.xlu0 %267
        %vm269 = vcmp.eq.s32.totalorder %v265, %v268
        %v270 = vsel %vm269, 0.9, 0.0007874016
        %v271 = vmul.f32 %v270, %v261
        %272 = vmatprep.subr.mxu0 0.0
        %273 = vmatpush1.msra.mxu0 1.0
        %274 = vmatprep.subr.mxu0 0.0
        %275 = vmatpush1.msra.mxu0 1.0
        %276 = vmatprep.subr.mxu0 0.0
        %277 = vmatpush1.msra.mxu0 1.0
        %278 = vmatprep.subr.mxu0 0.0
        %279 = vmatpush1.msra.mxu0 1.0
        %280 = vmatprep.subr.mxu0 0.0
        %281 = vmatpush1.msra.mxu0 1.0
        %282 = vmatprep.subr.mxu0 0.0
        %283 = vmatpush1.msra.mxu0 1.0
        %284 = vmatprep.subr.mxu0 0.0
        %285 = vmatpush1.msra.mxu0 1.0
        %286 = vmatprep.subr.mxu0 0.0
        %287 = vmatpush1.msra.mxu0 1.0
        %288 = vmatprep.subr.mxu0 0.0
        %289 = vmatpush1.msra.mxu0 1.0
        %290 = vmatprep.subr.mxu0 0.0
        %291 = vmatpush1.msra.mxu0 1.0
        %292 = vmatprep.subr.mxu0 0.0
        %293 = vmatpush1.msra.mxu0 1.0
        %294 = vmatprep.subr.mxu0 0.0
        %295 = vmatpush1.msra.mxu0 1.0
        %296 = vmatprep.subr.mxu0 0.0
        %297 = vmatpush1.msra.mxu0 1.0
        %298 = vmatprep.subr.mxu0 0.0
        %299 = vmatpush1.msra.mxu0 1.0
        %300 = vmatprep.subr.mxu0 0.0
        %301 = vmatpush1.msra.mxu0 1.0
        %302 = vmatprep.subr.mxu0 0.0
        %303 = vmatpush1.msra.mxu0 1.0
        %304 = vmatprep.subr.mxu0 0.0
        %305 = vmatpush2.msra.mxu0 0.0
        %306 = vmatprep.subr.mxu0 0.0
        %307 = vmatpush2.msra.mxu0 0.0
        %308 = vmatprep.subr.mxu0 0.0
        %309 = vmatpush2.msra.mxu0 0.0
        %310 = vmatprep.subr.mxu0 0.0
        %311 = vmatpush2.msra.mxu0 0.0
        %312 = vmatprep.subr.mxu0 0.0
        %313 = vmatpush2.msra.mxu0 0.0
        %314 = vmatprep.subr.mxu0 0.0
        %315 = vmatpush2.msra.mxu0 0.0
        %316 = vmatprep.subr.mxu0 0.0
        %317 = vmatpush2.msra.mxu0 0.0
        %318 = vmatprep.subr.mxu0 0.0
        %319 = vmatpush2.msra.mxu0 0.0
        %320 = vmatprep.subr.mxu0 0.0
        %321 = vmatpush2.msra.mxu0 0.0
        %322 = vmatprep.subr.mxu0 0.0
        %323 = vmatpush2.msra.mxu0 0.0
        %324 = vmatprep.subr.mxu0 0.0
        %325 = vmatpush2.msra.mxu0 0.0
        %326 = vmatprep.subr.mxu0 0.0
        %327 = vmatpush2.msra.mxu0 0.0
        %328 = vmatprep.subr.mxu0 0.0
        %329 = vmatpush2.msra.mxu0 0.0
        %330 = vmatprep.subr.mxu0 0.0
        %331 = vmatpush2.msra.mxu0 0.0
        %332 = vmatprep.subr.mxu0 0.0
        %333 = vmatpush2.msra.mxu0 0.0
        %334 = vmatprep.subr.mxu0 0.0
        %335 = vmatpush2.msra.mxu0 0.0
        %336 = vmatprep.mubr.f32.mxu0 0.0
        %v337 = vand.u32 %v263, 4294901760
        %v338 = vsub.f32 %v263, %v337
        %v339 = vand.u32 %v338, 4294901760
        %v340 = vsub.f32 %v338, %v339
        %v341 = vand.u32 %v340, 4294901760
        %342 = vmatmul.mubr.f32.gmra.mxu0 %v341
        %v343 = vpop.f32.mrf.mxu0
        %v344 = vadd.f32 0.0, %v343
        %v345 = vpop.f32.mrf.mxu0
        %346 = vdwg.mxu0
        %347 = vmatprep.subr.mxu0 0.0
        %348 = vmatpush1.msra.mxu0 0.0
        %349 = vmatprep.subr.mxu0 0.0
        %350 = vmatpush1.msra.mxu0 0.0
        %351 = vmatprep.subr.mxu0 0.0
        %352 = vmatpush1.msra.mxu0 0.0
        %353 = vmatprep.subr.mxu0 0.0
        %354 = vmatpush1.msra.mxu0 0.0
        %355 = vmatprep.subr.mxu0 0.0
        %356 = vmatpush1.msra.mxu0 0.0
        %357 = vmatprep.subr.mxu0 0.0
        %358 = vmatpush1.msra.mxu0 0.0
        %359 = vmatprep.subr.mxu0 0.0
        %360 = vmatpush1.msra.mxu0 0.0
        %361 = vmatprep.subr.mxu0 0.0
        %362 = vmatpush1.msra.mxu0 0.0
        %363 = vmatprep.subr.mxu0 0.0
        %364 = vmatpush1.msra.mxu0 0.0
        %365 = vmatprep.subr.mxu0 0.0
        %366 = vmatpush1.msra.mxu0 0.0
        %367 = vmatprep.subr.mxu0 0.0
        %368 = vmatpush1.msra.mxu0 0.0
        %369 = vmatprep.subr.mxu0 0.0
        %370 = vmatpush1.msra.mxu0 0.0
        %371 = vmatprep.subr.mxu0 0.0
        %372 = vmatpush1.msra.mxu0 0.0
        %373 = vmatprep.subr.mxu0 0.0
        %374 = vmatpush1.msra.mxu0 0.0
        %375 = vmatprep.subr.mxu0 0.0
        %376 = vmatpush1.msra.mxu0 0.0
        %377 = vmatprep.subr.mxu0 0.0
        %378 = vmatpush1.msra.mxu0 0.0
        %379 = vmatprep.subr.mxu0 0.0
        %380 = vmatpush2.msra.mxu0 0.0
        %381 = vmatprep.subr.mxu0 0.0
        %382 = vmatpush2.msra.mxu0 0.0
        %383 = vmatprep.subr.mxu0 0.0
        %384 = vmatpush2.msra.mxu0 0.0
        %385 = vmatprep.subr.mxu0 0.0
        %386 = vmatpush2.msra.mxu0 0.0
        %387 = vmatprep.subr.mxu0 0.0
        %388 = vmatpush2.msra.mxu0 0.0
        %389 = vmatprep.subr.mxu0 0.0
        %390 = vmatpush2.msra.mxu0 0.0
        %391 = vmatprep.subr.mxu0 0.0
        %392 = vmatpush2.msra.mxu0 0.0
        %393 = vmatprep.subr.mxu0 0.0
        %394 = vmatpush2.msra.mxu0 0.0
        %395 = vmatprep.subr.mxu0 0.0
        %396 = vmatpush2.msra.mxu0 0.0
        %397 = vmatprep.subr.mxu0 0.0
        %398 = vmatpush2.msra.mxu0 0.0
        %399 = vmatprep.subr.mxu0 0.0
        %400 = vmatpush2.msra.mxu0 0.0
        %401 = vmatprep.subr.mxu0 0.0
        %402 = vmatpush2.msra.mxu0 0.0
        %403 = vmatprep.subr.mxu0 0.0
        %404 = vmatpush2.msra.mxu0 0.0
        %405 = vmatprep.subr.mxu0 0.0
        %406 = vmatpush2.msra.mxu0 0.0
        %407 = vmatprep.subr.mxu0 0.0
        %408 = vmatpush2.msra.mxu0 0.0
        %409 = vmatprep.subr.mxu0 0.0
        %410 = vmatpush2.msra.mxu0 0.0
        %411 = vmatprep.mubr.f32.mxu0 0.0
        %v412 = vand.u32 %v263, 4294901760
        %413 = vmatmul.mubr.f32.gmra.mxu0 %v412
        %v414 = vpop.f32.mrf.mxu0
        %v415 = vadd.f32 %v344, %v414
        %v416 = vpop.f32.mrf.mxu0
        %417 = vdwg.mxu0
        %418 = vmatprep.subr.mxu0 0.0
        %419 = vmatpush1.msra.mxu0 0.0
        %420 = vmatprep.subr.mxu0 0.0
        %421 = vmatpush1.msra.mxu0 0.0
        %422 = vmatprep.subr.mxu0 0.0
        %423 = vmatpush1.msra.mxu0 0.0
        %424 = vmatprep.subr.mxu0 0.0
        %425 = vmatpush1.msra.mxu0 0.0
        %426 = vmatprep.subr.mxu0 0.0
        %427 = vmatpush1.msra.mxu0 0.0
        %428 = vmatprep.subr.mxu0 0.0
        %429 = vmatpush1.msra.mxu0 0.0
        %430 = vmatprep.subr.mxu0 0.0
        %431 = vmatpush1.msra.mxu0 0.0
        %432 = vmatprep.subr.mxu0 0.0
        %433 = vmatpush1.msra.mxu0 0.0
        %434 = vmatprep.subr.mxu0 0.0
        %435 = vmatpush1.msra.mxu0 0.0
        %436 = vmatprep.subr.mxu0 0.0
        %437 = vmatpush1.msra.mxu0 0.0
        %438 = vmatprep.subr.mxu0 0.0
        %439 = vmatpush1.msra.mxu0 0.0
        %440 = vmatprep.subr.mxu0 0.0
        %441 = vmatpush1.msra.mxu0 0.0
        %442 = vmatprep.subr.mxu0 0.0
        %443 = vmatpush1.msra.mxu0 0.0
        %444 = vmatprep.subr.mxu0 0.0
        %445 = vmatpush1.msra.mxu0 0.0
        %446 = vmatprep.subr.mxu0 0.0
        %447 = vmatpush1.msra.mxu0 0.0
        %448 = vmatprep.subr.mxu0 0.0
        %449 = vmatpush1.msra.mxu0 0.0
        %450 = vmatprep.subr.mxu0 0.0
        %451 = vmatpush2.msra.mxu0 0.0
        %452 = vmatprep.subr.mxu0 0.0
        %453 = vmatpush2.msra.mxu0 0.0
        %454 = vmatprep.subr.mxu0 0.0
        %455 = vmatpush2.msra.mxu0 0.0
        %456 = vmatprep.subr.mxu0 0.0
        %457 = vmatpush2.msra.mxu0 0.0
        %458 = vmatprep.subr.mxu0 0.0
        %459 = vmatpush2.msra.mxu0 0.0
        %460 = vmatprep.subr.mxu0 0.0
        %461 = vmatpush2.msra.mxu0 0.0
        %462 = vmatprep.subr.mxu0 0.0
        %463 = vmatpush2.msra.mxu0 0.0
        %464 = vmatprep.subr.mxu0 0.0
        %465 = vmatpush2.msra.mxu0 0.0
        %466 = vmatprep.subr.mxu0 0.0
        %467 = vmatpush2.msra.mxu0 0.0
        %468 = vmatprep.subr.mxu0 0.0
        %469 = vmatpush2.msra.mxu0 0.0
        %470 = vmatprep.subr.mxu0 0.0
        %471 = vmatpush2.msra.mxu0 0.0
        %472 = vmatprep.subr.mxu0 0.0
        %473 = vmatpush2.msra.mxu0 0.0
        %474 = vmatprep.subr.mxu0 0.0
        %475 = vmatpush2.msra.mxu0 0.0
        %476 = vmatprep.subr.mxu0 0.0
        %477 = vmatpush2.msra.mxu0 0.0
        %478 = vmatprep.subr.mxu0 0.0
        %479 = vmatpush2.msra.mxu0 0.0
        %480 = vmatprep.subr.mxu0 0.0
        %481 = vmatpush2.msra.mxu0 0.0
        %482 = vmatprep.mubr.f32.mxu0 0.0
        %v483 = vand.u32 %v263, 4294901760
        %v484 = vsub.f32 %v263, %v483
        %485 = vmatmul.mubr.f32.gmra.mxu0 %v484
        %v486 = vpop.f32.mrf.mxu0
        %v487 = vadd.f32 %v415, %v486
        %v488 = vpop.f32.mrf.mxu0
        %489 = vdwg.mxu0
        %490 = vmatprep.subr.mxu0 0.0
        %491 = vmatpush1.msra.mxu0 1.0
        %492 = vmatprep.subr.mxu0 0.0
        %493 = vmatpush1.msra.mxu0 1.0
        %494 = vmatprep.subr.mxu0 0.0
        %495 = vmatpush1.msra.mxu0 1.0
        %496 = vmatprep.subr.mxu0 0.0
        %497 = vmatpush1.msra.mxu0 1.0
        %498 = vmatprep.subr.mxu0 0.0
        %499 = vmatpush1.msra.mxu0 1.0
        %500 = vmatprep.subr.mxu0 0.0
        %501 = vmatpush1.msra.mxu0 1.0
        %502 = vmatprep.subr.mxu0 0.0
        %503 = vmatpush1.msra.mxu0 1.0
        %504 = vmatprep.subr.mxu0 0.0
        %505 = vmatpush1.msra.mxu0 1.0
        %506 = vmatprep.subr.mxu0 0.0
        %507 = vmatpush1.msra.mxu0 1.0
        %508 = vmatprep.subr.mxu0 0.0
        %509 = vmatpush1.msra.mxu0 1.0
        %510 = vmatprep.subr.mxu0 0.0
        %511 = vmatpush1.msra.mxu0 1.0
        %512 = vmatprep.subr.mxu0 0.0
        %513 = vmatpush1.msra.mxu0 1.0
        %514 = vmatprep.subr.mxu0 0.0
        %515 = vmatpush1.msra.mxu0 1.0
        %516 = vmatprep.subr.mxu0 0.0
        %517 = vmatpush1.msra.mxu0 1.0
        %518 = vmatprep.subr.mxu0 0.0
        %519 = vmatpush1.msra.mxu0 1.0
        %520 = vmatprep.subr.mxu0 0.0
        %521 = vmatpush1.msra.mxu0 1.0
        %522 = vmatprep.subr.mxu0 0.0
        %523 = vmatpush2.msra.mxu0 0.0
        %524 = vmatprep.subr.mxu0 0.0
        %525 = vmatpush2.msra.mxu0 0.0
        %526 = vmatprep.subr.mxu0 0.0
        %527 = vmatpush2.msra.mxu0 0.0
        %528 = vmatprep.subr.mxu0 0.0
        %529 = vmatpush2.msra.mxu0 0.0
        %530 = vmatprep.subr.mxu0 0.0
        %531 = vmatpush2.msra.mxu0 0.0
        %532 = vmatprep.subr.mxu0 0.0
        %533 = vmatpush2.msra.mxu0 0.0
        %534 = vmatprep.subr.mxu0 0.0
        %535 = vmatpush2.msra.mxu0 0.0
        %536 = vmatprep.subr.mxu0 0.0
        %537 = vmatpush2.msra.mxu0 0.0
        %538 = vmatprep.subr.mxu0 0.0
        %539 = vmatpush2.msra.mxu0 0.0
        %540 = vmatprep.subr.mxu0 0.0
        %541 = vmatpush2.msra.mxu0 0.0
        %542 = vmatprep.subr.mxu0 0.0
        %543 = vmatpush2.msra.mxu0 0.0
        %544 = vmatprep.subr.mxu0 0.0
        %545 = vmatpush2.msra.mxu0 0.0
        %546 = vmatprep.subr.mxu0 0.0
        %547 = vmatpush2.msra.mxu0 0.0
        %548 = vmatprep.subr.mxu0 0.0
        %549 = vmatpush2.msra.mxu0 0.0
        %550 = vmatprep.subr.mxu0 0.0
        %551 = vmatpush2.msra.mxu0 0.0
        %552 = vmatprep.subr.mxu0 0.0
        %553 = vmatpush2.msra.mxu0 0.0
        %554 = vmatprep.mubr.f32.mxu0 0.0
        %v555 = vand.u32 %v263, 4294901760
        %v556 = vsub.f32 %v263, %v555
        %v557 = vand.u32 %v556, 4294901760
        %558 = vmatmul.mubr.f32.gmra.mxu0 %v557
        %v559 = vpop.f32.mrf.mxu0
        %v560 = vadd.f32 %v487, %v559
        %v561 = vpop.f32.mrf.mxu0
        %562 = vdwg.mxu0
        %563 = vmatprep.subr.mxu0 0.0
        %564 = vmatpush1.msra.mxu0 0.0
        %565 = vmatprep.subr.mxu0 0.0
        %566 = vmatpush1.msra.mxu0 0.0
        %567 = vmatprep.subr.mxu0 0.0
        %568 = vmatpush1.msra.mxu0 0.0
        %569 = vmatprep.subr.mxu0 0.0
        %570 = vmatpush1.msra.mxu0 0.0
        %571 = vmatprep.subr.mxu0 0.0
        %572 = vmatpush1.msra.mxu0 0.0
        %573 = vmatprep.subr.mxu0 0.0
        %574 = vmatpush1.msra.mxu0 0.0
        %575 = vmatprep.subr.mxu0 0.0
        %576 = vmatpush1.msra.mxu0 0.0
        %577 = vmatprep.subr.mxu0 0.0
        %578 = vmatpush1.msra.mxu0 0.0
        %579 = vmatprep.subr.mxu0 0.0
        %580 = vmatpush1.msra.mxu0 0.0
        %581 = vmatprep.subr.mxu0 0.0
        %582 = vmatpush1.msra.mxu0 0.0
        %583 = vmatprep.subr.mxu0 0.0
        %584 = vmatpush1.msra.mxu0 0.0
        %585 = vmatprep.subr.mxu0 0.0
        %586 = vmatpush1.msra.mxu0 0.0
        %587 = vmatprep.subr.mxu0 0.0
        %588 = vmatpush1.msra.mxu0 0.0
        %589 = vmatprep.subr.mxu0 0.0
        %590 = vmatpush1.msra.mxu0 0.0
        %591 = vmatprep.subr.mxu0 0.0
        %592 = vmatpush1.msra.mxu0 0.0
        %593 = vmatprep.subr.mxu0 0.0
        %594 = vmatpush1.msra.mxu0 0.0
        %595 = vmatprep.subr.mxu0 0.0
        %596 = vmatpush2.msra.mxu0 0.0
        %597 = vmatprep.subr.mxu0 0.0
        %598 = vmatpush2.msra.mxu0 0.0
        %599 = vmatprep.subr.mxu0 0.0
        %600 = vmatpush2.msra.mxu0 0.0
        %601 = vmatprep.subr.mxu0 0.0
        %602 = vmatpush2.msra.mxu0 0.0
        %603 = vmatprep.subr.mxu0 0.0
        %604 = vmatpush2.msra.mxu0 0.0
        %605 = vmatprep.subr.mxu0 0.0
        %606 = vmatpush2.msra.mxu0 0.0
        %607 = vmatprep.subr.mxu0 0.0
        %608 = vmatpush2.msra.mxu0 0.0
        %609 = vmatprep.subr.mxu0 0.0
        %610 = vmatpush2.msra.mxu0 0.0
        %611 = vmatprep.subr.mxu0 0.0
        %612 = vmatpush2.msra.mxu0 0.0
        %613 = vmatprep.subr.mxu0 0.0
        %614 = vmatpush2.msra.mxu0 0.0
        %615 = vmatprep.subr.mxu0 0.0
        %616 = vmatpush2.msra.mxu0 0.0
        %617 = vmatprep.subr.mxu0 0.0
        %618 = vmatpush2.msra.mxu0 0.0
        %619 = vmatprep.subr.mxu0 0.0
        %620 = vmatpush2.msra.mxu0 0.0
        %621 = vmatprep.subr.mxu0 0.0
        %622 = vmatpush2.msra.mxu0 0.0
        %623 = vmatprep.subr.mxu0 0.0
        %624 = vmatpush2.msra.mxu0 0.0
        %625 = vmatprep.subr.mxu0 0.0
        %626 = vmatpush2.msra.mxu0 0.0
        %627 = vmatprep.mubr.f32.mxu0 0.0
        %v628 = vand.u32 %v263, 4294901760
        %629 = vmatmul.mubr.f32.gmra.mxu0 %v628
        %v630 = vpop.f32.mrf.mxu0
        %v631 = vadd.f32 %v560, %v630
        %v632 = vpop.f32.mrf.mxu0
        %633 = vdwg.mxu0
        %634 = vmatprep.subr.mxu0 0.0
        %635 = vmatpush1.msra.mxu0 1.0
        %636 = vmatprep.subr.mxu0 0.0
        %637 = vmatpush1.msra.mxu0 1.0
        %638 = vmatprep.subr.mxu0 0.0
        %639 = vmatpush1.msra.mxu0 1.0
        %640 = vmatprep.subr.mxu0 0.0
        %641 = vmatpush1.msra.mxu0 1.0
        %642 = vmatprep.subr.mxu0 0.0
        %643 = vmatpush1.msra.mxu0 1.0
        %644 = vmatprep.subr.mxu0 0.0
        %645 = vmatpush1.msra.mxu0 1.0
        %646 = vmatprep.subr.mxu0 0.0
        %647 = vmatpush1.msra.mxu0 1.0
        %648 = vmatprep.subr.mxu0 0.0
        %649 = vmatpush1.msra.mxu0 1.0
        %650 = vmatprep.subr.mxu0 0.0
        %651 = vmatpush1.msra.mxu0 1.0
        %652 = vmatprep.subr.mxu0 0.0
        %653 = vmatpush1.msra.mxu0 1.0
        %654 = vmatprep.subr.mxu0 0.0
        %655 = vmatpush1.msra.mxu0 1.0
        %656 = vmatprep.subr.mxu0 0.0
        %657 = vmatpush1.msra.mxu0 1.0
        %658 = vmatprep.subr.mxu0 0.0
        %659 = vmatpush1.msra.mxu0 1.0
        %660 = vmatprep.subr.mxu0 0.0
        %661 = vmatpush1.msra.mxu0 1.0
        %662 = vmatprep.subr.mxu0 0.0
        %663 = vmatpush1.msra.mxu0 1.0
        %664 = vmatprep.subr.mxu0 0.0
        %665 = vmatpush1.msra.mxu0 1.0
        %666 = vmatprep.subr.mxu0 0.0
        %667 = vmatpush2.msra.mxu0 0.0
        %668 = vmatprep.subr.mxu0 0.0
        %669 = vmatpush2.msra.mxu0 0.0
        %670 = vmatprep.subr.mxu0 0.0
        %671 = vmatpush2.msra.mxu0 0.0
        %672 = vmatprep.subr.mxu0 0.0
        %673 = vmatpush2.msra.mxu0 0.0
        %674 = vmatprep.subr.mxu0 0.0
        %675 = vmatpush2.msra.mxu0 0.0
        %676 = vmatprep.subr.mxu0 0.0
        %677 = vmatpush2.msra.mxu0 0.0
        %678 = vmatprep.subr.mxu0 0.0
        %679 = vmatpush2.msra.mxu0 0.0
        %680 = vmatprep.subr.mxu0 0.0
        %681 = vmatpush2.msra.mxu0 0.0
        %682 = vmatprep.subr.mxu0 0.0
        %683 = vmatpush2.msra.mxu0 0.0
        %684 = vmatprep.subr.mxu0 0.0
        %685 = vmatpush2.msra.mxu0 0.0
        %686 = vmatprep.subr.mxu0 0.0
        %687 = vmatpush2.msra.mxu0 0.0
        %688 = vmatprep.subr.mxu0 0.0
        %689 = vmatpush2.msra.mxu0 0.0
        %690 = vmatprep.subr.mxu0 0.0
        %691 = vmatpush2.msra.mxu0 0.0
        %692 = vmatprep.subr.mxu0 0.0
        %693 = vmatpush2.msra.mxu0 0.0
        %694 = vmatprep.subr.mxu0 0.0
        %695 = vmatpush2.msra.mxu0 0.0
        %696 = vmatprep.subr.mxu0 0.0
        %697 = vmatpush2.msra.mxu0 0.0
        %698 = vmatprep.mubr.f32.mxu0 0.0
        %v699 = vand.u32 %v263, 4294901760
        %700 = vmatmul.mubr.f32.gmra.mxu0 %v699
        %v701 = vpop.f32.mrf.mxu0
        %v702 = vadd.f32 %v631, %v701
        %v703 = vpop.f32.mrf.mxu0
        %704 = vdwg.mxu0
        %705 = vmatprep.subr.mxu0 0.0
        %706 = vmatpush1.msra.mxu0 1.0
        %707 = vmatprep.subr.mxu0 0.0
        %708 = vmatpush1.msra.mxu0 1.0
        %709 = vmatprep.subr.mxu0 0.0
        %710 = vmatpush1.msra.mxu0 1.0
        %711 = vmatprep.subr.mxu0 0.0
        %712 = vmatpush1.msra.mxu0 1.0
        %713 = vmatprep.subr.mxu0 0.0
        %714 = vmatpush1.msra.mxu0 1.0
        %715 = vmatprep.subr.mxu0 0.0
        %716 = vmatpush1.msra.mxu0 1.0
        %717 = vmatprep.subr.mxu0 0.0
        %718 = vmatpush1.msra.mxu0 1.0
        %719 = vmatprep.subr.mxu0 0.0
        %720 = vmatpush1.msra.mxu0 1.0
        %721 = vmatprep.subr.mxu0 0.0
        %722 = vmatpush1.msra.mxu0 1.0
        %723 = vmatprep.subr.mxu0 0.0
        %724 = vmatpush1.msra.mxu0 1.0
        %725 = vmatprep.subr.mxu0 0.0
        %726 = vmatpush1.msra.mxu0 1.0
        %727 = vmatprep.subr.mxu0 0.0
        %728 = vmatpush1.msra.mxu0 1.0
        %729 = vmatprep.subr.mxu0 0.0
        %730 = vmatpush1.msra.mxu0 1.0
        %731 = vmatprep.subr.mxu0 0.0
        %732 = vmatpush1.msra.mxu0 1.0
        %733 = vmatprep.subr.mxu0 0.0
        %734 = vmatpush1.msra.mxu0 1.0
        %735 = vmatprep.subr.mxu0 0.0
        %736 = vmatpush1.msra.mxu0 1.0
        %737 = vmatprep.subr.mxu0 0.0
        %738 = vmatpush2.msra.mxu0 0.0
        %739 = vmatprep.subr.mxu0 0.0
        %740 = vmatpush2.msra.mxu0 0.0
        %741 = vmatprep.subr.mxu0 0.0
        %742 = vmatpush2.msra.mxu0 0.0
        %743 = vmatprep.subr.mxu0 0.0
        %744 = vmatpush2.msra.mxu0 0.0
        %745 = vmatprep.subr.mxu0 0.0
        %746 = vmatpush2.msra.mxu0 0.0
        %747 = vmatprep.subr.mxu0 0.0
        %748 = vmatpush2.msra.mxu0 0.0
        %749 = vmatprep.subr.mxu0 0.0
        %750 = vmatpush2.msra.mxu0 0.0
        %751 = vmatprep.subr.mxu0 0.0
        %752 = vmatpush2.msra.mxu0 0.0
        %753 = vmatprep.subr.mxu0 0.0
        %754 = vmatpush2.msra.mxu0 0.0
        %755 = vmatprep.subr.mxu0 0.0
        %756 = vmatpush2.msra.mxu0 0.0
        %757 = vmatprep.subr.mxu0 0.0
        %758 = vmatpush2.msra.mxu0 0.0
        %759 = vmatprep.subr.mxu0 0.0
        %760 = vmatpush2.msra.mxu0 0.0
        %761 = vmatprep.subr.mxu0 0.0
        %762 = vmatpush2.msra.mxu0 0.0
        %763 = vmatprep.subr.mxu0 0.0
        %764 = vmatpush2.msra.mxu0 0.0
        %765 = vmatprep.subr.mxu0 0.0
        %766 = vmatpush2.msra.mxu0 0.0
        %767 = vmatprep.subr.mxu0 0.0
        %768 = vmatpush2.msra.mxu0 0.0
        %769 = vmatprep.mubr.f32.mxu0 0.0
        %v770 = vand.u32 %v271, 4294901760
        %v771 = vsub.f32 %v271, %v770
        %v772 = vand.u32 %v771, 4294901760
        %v773 = vsub.f32 %v771, %v772
        %v774 = vand.u32 %v773, 4294901760
        %775 = vmatmul.mubr.f32.gmra.mxu0 %v774
        %v776 = vpop.f32.mrf.mxu0
        %v777 = vadd.f32 0.0, %v776
        %v778 = vpop.f32.mrf.mxu0
        %779 = vdwg.mxu0
        %780 = vmatprep.subr.mxu0 0.0
        %781 = vmatpush1.msra.mxu0 0.0
        %782 = vmatprep.subr.mxu0 0.0
        %783 = vmatpush1.msra.mxu0 0.0
        %784 = vmatprep.subr.mxu0 0.0
        %785 = vmatpush1.msra.mxu0 0.0
        %786 = vmatprep.subr.mxu0 0.0
        %787 = vmatpush1.msra.mxu0 0.0
        %788 = vmatprep.subr.mxu0 0.0
        %789 = vmatpush1.msra.mxu0 0.0
        %790 = vmatprep.subr.mxu0 0.0
        %791 = vmatpush1.msra.mxu0 0.0
        %792 = vmatprep.subr.mxu0 0.0
        %793 = vmatpush1.msra.mxu0 0.0
        %794 = vmatprep.subr.mxu0 0.0
        %795 = vmatpush1.msra.mxu0 0.0
        %796 = vmatprep.subr.mxu0 0.0
        %797 = vmatpush1.msra.mxu0 0.0
        %798 = vmatprep.subr.mxu0 0.0
        %799 = vmatpush1.msra.mxu0 0.0
        %800 = vmatprep.subr.mxu0 0.0
        %801 = vmatpush1.msra.mxu0 0.0
        %802 = vmatprep.subr.mxu0 0.0
        %803 = vmatpush1.msra.mxu0 0.0
        %804 = vmatprep.subr.mxu0 0.0
        %805 = vmatpush1.msra.mxu0 0.0
        %806 = vmatprep.subr.mxu0 0.0
        %807 = vmatpush1.msra.mxu0 0.0
        %808 = vmatprep.subr.mxu0 0.0
        %809 = vmatpush1.msra.mxu0 0.0
        %810 = vmatprep.subr.mxu0 0.0
        %811 = vmatpush1.msra.mxu0 0.0
        %812 = vmatprep.subr.mxu0 0.0
        %813 = vmatpush2.msra.mxu0 0.0
        %814 = vmatprep.subr.mxu0 0.0
        %815 = vmatpush2.msra.mxu0 0.0
        %816 = vmatprep.subr.mxu0 0.0
        %817 = vmatpush2.msra.mxu0 0.0
        %818 = vmatprep.subr.mxu0 0.0
        %819 = vmatpush2.msra.mxu0 0.0
        %820 = vmatprep.subr.mxu0 0.0
        %821 = vmatpush2.msra.mxu0 0.0
        %822 = vmatprep.subr.mxu0 0.0
        %823 = vmatpush2.msra.mxu0 0.0
        %824 = vmatprep.subr.mxu0 0.0
        %825 = vmatpush2.msra.mxu0 0.0
        %826 = vmatprep.subr.mxu0 0.0
        %827 = vmatpush2.msra.mxu0 0.0
        %828 = vmatprep.subr.mxu0 0.0
        %829 = vmatpush2.msra.mxu0 0.0
        %830 = vmatprep.subr.mxu0 0.0
        %831 = vmatpush2.msra.mxu0 0.0
        %832 = vmatprep.subr.mxu0 0.0
        %833 = vmatpush2.msra.mxu0 0.0
        %834 = vmatprep.subr.mxu0 0.0
        %835 = vmatpush2.msra.mxu0 0.0
        %836 = vmatprep.subr.mxu0 0.0
        %837 = vmatpush2.msra.mxu0 0.0
        %838 = vmatprep.subr.mxu0 0.0
        %839 = vmatpush2.msra.mxu0 0.0
        %840 = vmatprep.subr.mxu0 0.0
        %841 = vmatpush2.msra.mxu0 0.0
        %842 = vmatprep.subr.mxu0 0.0
        %843 = vmatpush2.msra.mxu0 0.0
        %844 = vmatprep.mubr.f32.mxu0 0.0
        %v845 = vand.u32 %v271, 4294901760
        %846 = vmatmul.mubr.f32.gmra.mxu0 %v845
        %v847 = vpop.f32.mrf.mxu0
        %v848 = vadd.f32 %v777, %v847
        %v849 = vpop.f32.mrf.mxu0
        %850 = vdwg.mxu0
        %851 = vmatprep.subr.mxu0 0.0
        %852 = vmatpush1.msra.mxu0 0.0
        %853 = vmatprep.subr.mxu0 0.0
        %854 = vmatpush1.msra.mxu0 0.0
        %855 = vmatprep.subr.mxu0 0.0
        %856 = vmatpush1.msra.mxu0 0.0
        %857 = vmatprep.subr.mxu0 0.0
        %858 = vmatpush1.msra.mxu0 0.0
        %859 = vmatprep.subr.mxu0 0.0
        %860 = vmatpush1.msra.mxu0 0.0
        %861 = vmatprep.subr.mxu0 0.0
        %862 = vmatpush1.msra.mxu0 0.0
        %863 = vmatprep.subr.mxu0 0.0
        %864 = vmatpush1.msra.mxu0 0.0
        %865 = vmatprep.subr.mxu0 0.0
        %866 = vmatpush1.msra.mxu0 0.0
        %867 = vmatprep.subr.mxu0 0.0
        %868 = vmatpush1.msra.mxu0 0.0
        %869 = vmatprep.subr.mxu0 0.0
        %870 = vmatpush1.msra.mxu0 0.0
        %871 = vmatprep.subr.mxu0 0.0
        %872 = vmatpush1.msra.mxu0 0.0
        %873 = vmatprep.subr.mxu0 0.0
        %874 = vmatpush1.msra.mxu0 0.0
        %875 = vmatprep.subr.mxu0 0.0
        %876 = vmatpush1.msra.mxu0 0.0
        %877 = vmatprep.subr.mxu0 0.0
        %878 = vmatpush1.msra.mxu0 0.0
        %879 = vmatprep.subr.mxu0 0.0
        %880 = vmatpush1.msra.mxu0 0.0
        %881 = vmatprep.subr.mxu0 0.0
        %882 = vmatpush1.msra.mxu0 0.0
        %883 = vmatprep.subr.mxu0 0.0
        %884 = vmatpush2.msra.mxu0 0.0
        %885 = vmatprep.subr.mxu0 0.0
        %886 = vmatpush2.msra.mxu0 0.0
        %887 = vmatprep.subr.mxu0 0.0
        %888 = vmatpush2.msra.mxu0 0.0
        %889 = vmatprep.subr.mxu0 0.0
        %890 = vmatpush2.msra.mxu0 0.0
        %891 = vmatprep.subr.mxu0 0.0
        %892 = vmatpush2.msra.mxu0 0.0
        %893 = vmatprep.subr.mxu0 0.0
        %894 = vmatpush2.msra.mxu0 0.0
        %895 = vmatprep.subr.mxu0 0.0
        %896 = vmatpush2.msra.mxu0 0.0
        %897 = vmatprep.subr.mxu0 0.0
        %898 = vmatpush2.msra.mxu0 0.0
        %899 = vmatprep.subr.mxu0 0.0
        %900 = vmatpush2.msra.mxu0 0.0
        %901 = vmatprep.subr.mxu0 0.0
        %902 = vmatpush2.msra.mxu0 0.0
        %903 = vmatprep.subr.mxu0 0.0
        %904 = vmatpush2.msra.mxu0 0.0
        %905 = vmatprep.subr.mxu0 0.0
        %906 = vmatpush2.msra.mxu0 0.0
        %907 = vmatprep.subr.mxu0 0.0
        %908 = vmatpush2.msra.mxu0 0.0
        %909 = vmatprep.subr.mxu0 0.0
        %910 = vmatpush2.msra.mxu0 0.0
        %911 = vmatprep.subr.mxu0 0.0
        %912 = vmatpush2.msra.mxu0 0.0
        %913 = vmatprep.subr.mxu0 0.0
        %914 = vmatpush2.msra.mxu0 0.0
        %915 = vmatprep.mubr.f32.mxu0 0.0
        %v916 = vand.u32 %v271, 4294901760
        %v917 = vsub.f32 %v271, %v916
        %918 = vmatmul.mubr.f32.gmra.mxu0 %v917
        %v919 = vpop.f32.mrf.mxu0
        %v920 = vadd.f32 %v848, %v919
        %v921 = vpop.f32.mrf.mxu0
        %922 = vdwg.mxu0
        %923 = vmatprep.subr.mxu0 0.0
        %924 = vmatpush1.msra.mxu0 1.0
        %925 = vmatprep.subr.mxu0 0.0
        %926 = vmatpush1.msra.mxu0 1.0
        %927 = vmatprep.subr.mxu0 0.0
        %928 = vmatpush1.msra.mxu0 1.0
        %929 = vmatprep.subr.mxu0 0.0
        %930 = vmatpush1.msra.mxu0 1.0
        %931 = vmatprep.subr.mxu0 0.0
        %932 = vmatpush1.msra.mxu0 1.0
        %933 = vmatprep.subr.mxu0 0.0
        %934 = vmatpush1.msra.mxu0 1.0
        %935 = vmatprep.subr.mxu0 0.0
        %936 = vmatpush1.msra.mxu0 1.0
        %937 = vmatprep.subr.mxu0 0.0
        %938 = vmatpush1.msra.mxu0 1.0
        %939 = vmatprep.subr.mxu0 0.0
        %940 = vmatpush1.msra.mxu0 1.0
        %941 = vmatprep.subr.mxu0 0.0
        %942 = vmatpush1.msra.mxu0 1.0
        %943 = vmatprep.subr.mxu0 0.0
        %944 = vmatpush1.msra.mxu0 1.0
        %945 = vmatprep.subr.mxu0 0.0
        %946 = vmatpush1.msra.mxu0 1.0
        %947 = vmatprep.subr.mxu0 0.0
        %948 = vmatpush1.msra.mxu0 1.0
        %949 = vmatprep.subr.mxu0 0.0
        %950 = vmatpush1.msra.mxu0 1.0
        %951 = vmatprep.subr.mxu0 0.0
        %952 = vmatpush1.msra.mxu0 1.0
        %953 = vmatprep.subr.mxu0 0.0
        %954 = vmatpush1.msra.mxu0 1.0
        %955 = vmatprep.subr.mxu0 0.0
        %956 = vmatpush2.msra.mxu0 0.0
        %957 = vmatprep.subr.mxu0 0.0
        %958 = vmatpush2.msra.mxu0 0.0
        %959 = vmatprep.subr.mxu0 0.0
        %960 = vmatpush2.msra.mxu0 0.0
        %961 = vmatprep.subr.mxu0 0.0
        %962 = vmatpush2.msra.mxu0 0.0
        %963 = vmatprep.subr.mxu0 0.0
        %964 = vmatpush2.msra.mxu0 0.0
        %965 = vmatprep.subr.mxu0 0.0
        %966 = vmatpush2.msra.mxu0 0.0
        %967 = vmatprep.subr.mxu0 0.0
        %968 = vmatpush2.msra.mxu0 0.0
        %969 = vmatprep.subr.mxu0 0.0
        %970 = vmatpush2.msra.mxu0 0.0
        %971 = vmatprep.subr.mxu0 0.0
        %972 = vmatpush2.msra.mxu0 0.0
        %973 = vmatprep.subr.mxu0 0.0
        %974 = vmatpush2.msra.mxu0 0.0
        %975 = vmatprep.subr.mxu0 0.0
        %976 = vmatpush2.msra.mxu0 0.0
        %977 = vmatprep.subr.mxu0 0.0
        %978 = vmatpush2.msra.mxu0 0.0
        %979 = vmatprep.subr.mxu0 0.0
        %980 = vmatpush2.msra.mxu0 0.0
        %981 = vmatprep.subr.mxu0 0.0
        %982 = vmatpush2.msra.mxu0 0.0
        %983 = vmatprep.subr.mxu0 0.0
        %984 = vmatpush2.msra.mxu0 0.0
        %985 = vmatprep.subr.mxu0 0.0
        %986 = vmatpush2.msra.mxu0 0.0
        %987 = vmatprep.mubr.f32.mxu0 0.0
        %v988 = vand.u32 %v271, 4294901760
        %v989 = vsub.f32 %v271, %v988
        %v990 = vand.u32 %v989, 4294901760
        %991 = vmatmul.mubr.f32.gmra.mxu0 %v990
        %v992 = vpop.f32.mrf.mxu0
        %v993 = vadd.f32 %v920, %v992
        %v994 = vpop.f32.mrf.mxu0
        %995 = vdwg.mxu0
        %996 = vmatprep.subr.mxu0 0.0
        %997 = vmatpush1.msra.mxu0 0.0
        %998 = vmatprep.subr.mxu0 0.0
        %999 = vmatpush1.msra.mxu0 0.0
        %1000 = vmatprep.subr.mxu0 0.0
        %1001 = vmatpush1.msra.mxu0 0.0
        %1002 = vmatprep.subr.mxu0 0.0
        %1003 = vmatpush1.msra.mxu0 0.0
        %1004 = vmatprep.subr.mxu0 0.0
        %1005 = vmatpush1.msra.mxu0 0.0
        %1006 = vmatprep.subr.mxu0 0.0
        %1007 = vmatpush1.msra.mxu0 0.0
        %1008 = vmatprep.subr.mxu0 0.0
        %1009 = vmatpush1.msra.mxu0 0.0
        %1010 = vmatprep.subr.mxu0 0.0
        %1011 = vmatpush1.msra.mxu0 0.0
        %1012 = vmatprep.subr.mxu0 0.0
        %1013 = vmatpush1.msra.mxu0 0.0
        %1014 = vmatprep.subr.mxu0 0.0
        %1015 = vmatpush1.msra.mxu0 0.0
        %1016 = vmatprep.subr.mxu0 0.0
        %1017 = vmatpush1.msra.mxu0 0.0
        %1018 = vmatprep.subr.mxu0 0.0
        %1019 = vmatpush1.msra.mxu0 0.0
        %1020 = vmatprep.subr.mxu0 0.0
        %1021 = vmatpush1.msra.mxu0 0.0
        %1022 = vmatprep.subr.mxu0 0.0
        %1023 = vmatpush1.msra.mxu0 0.0
        %1024 = vmatprep.subr.mxu0 0.0
        %1025 = vmatpush1.msra.mxu0 0.0
        %1026 = vmatprep.subr.mxu0 0.0
        %1027 = vmatpush1.msra.mxu0 0.0
        %1028 = vmatprep.subr.mxu0 0.0
        %1029 = vmatpush2.msra.mxu0 0.0
        %1030 = vmatprep.subr.mxu0 0.0
        %1031 = vmatpush2.msra.mxu0 0.0
        %1032 = vmatprep.subr.mxu0 0.0
        %1033 = vmatpush2.msra.mxu0 0.0
        %1034 = vmatprep.subr.mxu0 0.0
        %1035 = vmatpush2.msra.mxu0 0.0
        %1036 = vmatprep.subr.mxu0 0.0
        %1037 = vmatpush2.msra.mxu0 0.0
        %1038 = vmatprep.subr.mxu0 0.0
        %1039 = vmatpush2.msra.mxu0 0.0
        %1040 = vmatprep.subr.mxu0 0.0
        %1041 = vmatpush2.msra.mxu0 0.0
        %1042 = vmatprep.subr.mxu0 0.0
        %1043 = vmatpush2.msra.mxu0 0.0
        %1044 = vmatprep.subr.mxu0 0.0
        %1045 = vmatpush2.msra.mxu0 0.0
        %1046 = vmatprep.subr.mxu0 0.0
        %1047 = vmatpush2.msra.mxu0 0.0
        %1048 = vmatprep.subr.mxu0 0.0
        %1049 = vmatpush2.msra.mxu0 0.0
        %1050 = vmatprep.subr.mxu0 0.0
        %1051 = vmatpush2.msra.mxu0 0.0
        %1052 = vmatprep.subr.mxu0 0.0
        %1053 = vmatpush2.msra.mxu0 0.0
        %1054 = vmatprep.subr.mxu0 0.0
        %1055 = vmatpush2.msra.mxu0 0.0
        %1056 = vmatprep.subr.mxu0 0.0
        %1057 = vmatpush2.msra.mxu0 0.0
        %1058 = vmatprep.subr.mxu0 0.0
        %1059 = vmatpush2.msra.mxu0 0.0
        %1060 = vmatprep.mubr.f32.mxu0 0.0
        %v1061 = vand.u32 %v271, 4294901760
        %1062 = vmatmul.mubr.f32.gmra.mxu0 %v1061
        %v1063 = vpop.f32.mrf.mxu0
        %v1064 = vadd.f32 %v993, %v1063
        %v1065 = vpop.f32.mrf.mxu0
        %1066 = vdwg.mxu0
        %1067 = vmatprep.subr.mxu0 0.0
        %1068 = vmatpush1.msra.mxu0 1.0
        %1069 = vmatprep.subr.mxu0 0.0
        %1070 = vmatpush1.msra.mxu0 1.0
        %1071 = vmatprep.subr.mxu0 0.0
        %1072 = vmatpush1.msra.mxu0 1.0
        %1073 = vmatprep.subr.mxu0 0.0
        %1074 = vmatpush1.msra.mxu0 1.0
        %1075 = vmatprep.subr.mxu0 0.0
        %1076 = vmatpush1.msra.mxu0 1.0
        %1077 = vmatprep.subr.mxu0 0.0
        %1078 = vmatpush1.msra.mxu0 1.0
        %1079 = vmatprep.subr.mxu0 0.0
        %1080 = vmatpush1.msra.mxu0 1.0
        %1081 = vmatprep.subr.mxu0 0.0
        %1082 = vmatpush1.msra.mxu0 1.0
        %1083 = vmatprep.subr.mxu0 0.0
        %1084 = vmatpush1.msra.mxu0 1.0
        %1085 = vmatprep.subr.mxu0 0.0
        %1086 = vmatpush1.msra.mxu0 1.0
        %1087 = vmatprep.subr.mxu0 0.0
        %1088 = vmatpush1.msra.mxu0 1.0
        %1089 = vmatprep.subr.mxu0 0.0
        %1090 = vmatpush1.msra.mxu0 1.0
        %1091 = vmatprep.subr.mxu0 0.0
        %1092 = vmatpush1.msra.mxu0 1.0
        %1093 = vmatprep.subr.mxu0 0.0
        %1094 = vmatpush1.msra.mxu0 1.0
        %1095 = vmatprep.subr.mxu0 0.0
        %1096 = vmatpush1.msra.mxu0 1.0
        %1097 = vmatprep.subr.mxu0 0.0
        %1098 = vmatpush1.msra.mxu0 1.0
        %1099 = vmatprep.subr.mxu0 0.0
        %1100 = vmatpush2.msra.mxu0 0.0
        %1101 = vmatprep.subr.mxu0 0.0
        %1102 = vmatpush2.msra.mxu0 0.0
        %1103 = vmatprep.subr.mxu0 0.0
        %1104 = vmatpush2.msra.mxu0 0.0
        %1105 = vmatprep.subr.mxu0 0.0
        %1106 = vmatpush2.msra.mxu0 0.0
        %1107 = vmatprep.subr.mxu0 0.0
        %1108 = vmatpush2.msra.mxu0 0.0
        %1109 = vmatprep.subr.mxu0 0.0
        %1110 = vmatpush2.msra.mxu0 0.0
        %1111 = vmatprep.subr.mxu0 0.0
        %1112 = vmatpush2.msra.mxu0 0.0
        %1113 = vmatprep.subr.mxu0 0.0
        %1114 = vmatpush2.msra.mxu0 0.0
        %1115 = vmatprep.subr.mxu0 0.0
        %1116 = vmatpush2.msra.mxu0 0.0
        %1117 = vmatprep.subr.mxu0 0.0
        %1118 = vmatpush2.msra.mxu0 0.0
        %1119 = vmatprep.subr.mxu0 0.0
        %1120 = vmatpush2.msra.mxu0 0.0
        %1121 = vmatprep.subr.mxu0 0.0
        %1122 = vmatpush2.msra.mxu0 0.0
        %1123 = vmatprep.subr.mxu0 0.0
        %1124 = vmatpush2.msra.mxu0 0.0
        %1125 = vmatprep.subr.mxu0 0.0
        %1126 = vmatpush2.msra.mxu0 0.0
        %1127 = vmatprep.subr.mxu0 0.0
        %1128 = vmatpush2.msra.mxu0 0.0
        %1129 = vmatprep.subr.mxu0 0.0
        %1130 = vmatpush2.msra.mxu0 0.0
        %1131 = vmatprep.mubr.f32.mxu0 0.0
        %v1132 = vand.u32 %v271, 4294901760
        %1133 = vmatmul.mubr.f32.gmra.mxu0 %v1132
        %v1134 = vpop.f32.mrf.mxu0
        %v1135 = vadd.f32 %v1064, %v1134
        %v1136 = vpop.f32.mrf.mxu0
        %1137 = vdwg.mxu0
        %v1138 = vlog2.pop %v702
        %v1139 = vmul.f32 %v1138, 0.6931472
        %v1140 = vadd.f32 %v1139, -0.8095017
        %v1141 = vsub.f32 %v1140, %v1135
        %v1142 = vld [vmem:[%s204] sm:$0xff]
        %1143 = vmax.xlane.f32.xlu0 %v1142
        %v1144 = vpop.xlane.xlu0 %1143
        %v1145 = vsub.f32 %v1142, %v1144
        %v1146 = vmul.f32 %v1145, 1.442695
        %v1147 = vpow.pop %v1146
        %1148 = vset.pattern.permute.xlu0 1
        %1149 = vperm.xlu0 %1148, %v256
        %v1150 = vpop.permute.xlu0 %1149
        %vm1151 = vcmp.eq.s32.totalorder %v265, %v1150
        %v1152 = vsel %vm1151, 0.9, 0.0007874016
        %v1153 = vmul.f32 %v1152, %v1145
        %1154 = vmatprep.subr.mxu0 0.0
        %1155 = vmatpush1.msra.mxu0 1.0
        %1156 = vmatprep.subr.mxu0 0.0
        %1157 = vmatpush1.msra.mxu0 1.0
        %1158 = vmatprep.subr.mxu0 0.0
        %1159 = vmatpush1.msra.mxu0 1.0
        %1160 = vmatprep.subr.mxu0 0.0
        %1161 = vmatpush1.msra.mxu0 1.0
        %1162 = vmatprep.subr.mxu0 0.0
        %1163 = vmatpush1.msra.mxu0 1.0
        %1164 = vmatprep.subr.mxu0 0.0
        %1165 = vmatpush1.msra.mxu0 1.0
        %1166 = vmatprep.subr.mxu0 0.0
        %1167 = vmatpush1.msra.mxu0 1.0
        %1168 = vmatprep.subr.mxu0 0.0
        %1169 = vmatpush1.msra.mxu0 1.0
        %1170 = vmatprep.subr.mxu0 0.0
        %1171 = vmatpush1.msra.mxu0 1.0
        %1172 = vmatprep.subr.mxu0 0.0
        %1173 = vmatpush1.msra.mxu0 1.0
        %1174 = vmatprep.subr.mxu0 0.0
        %1175 = vmatpush1.msra.mxu0 1.0
        %1176 = vmatprep.subr.mxu0 0.0
        %1177 = vmatpush1.msra.mxu0 1.0
        %1178 = vmatprep.subr.mxu0 0.0
        %1179 = vmatpush1.msra.mxu0 1.0
        %1180 = vmatprep.subr.mxu0 0.0
        %1181 = vmatpush1.msra.mxu0 1.0
        %1182 = vmatprep.subr.mxu0 0.0
        %1183 = vmatpush1.msra.mxu0 1.0
        %1184 = vmatprep.subr.mxu0 0.0
        %1185 = vmatpush1.msra.mxu0 1.0
        %1186 = vmatprep.subr.mxu0 0.0
        %1187 = vmatpush2.msra.mxu0 0.0
        %1188 = vmatprep.subr.mxu0 0.0
        %1189 = vmatpush2.msra.mxu0 0.0
        %1190 = vmatprep.subr.mxu0 0.0
        %1191 = vmatpush2.msra.mxu0 0.0
        %1192 = vmatprep.subr.mxu0 0.0
        %1193 = vmatpush2.msra.mxu0 0.0
        %1194 = vmatprep.subr.mxu0 0.0
        %1195 = vmatpush2.msra.mxu0 0.0
        %1196 = vmatprep.subr.mxu0 0.0
        %1197 = vmatpush2.msra.mxu0 0.0
        %1198 = vmatprep.subr.mxu0 0.0
        %1199 = vmatpush2.msra.mxu0 0.0
        %1200 = vmatprep.subr.mxu0 0.0
        %1201 = vmatpush2.msra.mxu0 0.0
        %1202 = vmatprep.subr.mxu0 0.0
        %1203 = vmatpush2.msra.mxu0 0.0
        %1204 = vmatprep.subr.mxu0 0.0
        %1205 = vmatpush2.msra.mxu0 0.0
        %1206 = vmatprep.subr.mxu0 0.0
        %1207 = vmatpush2.msra.mxu0 0.0
        %1208 = vmatprep.subr.mxu0 0.0
        %1209 = vmatpush2.msra.mxu0 0.0
        %1210 = vmatprep.subr.mxu0 0.0
        %1211 = vmatpush2.msra.mxu0 0.0
        %1212 = vmatprep.subr.mxu0 0.0
        %1213 = vmatpush2.msra.mxu0 0.0
        %1214 = vmatprep.subr.mxu0 0.0
        %1215 = vmatpush2.msra.mxu0 0.0
        %1216 = vmatprep.subr.mxu0 0.0
        %1217 = vmatpush2.msra.mxu0 0.0
        %1218 = vmatprep.mubr.f32.mxu0 0.0
        %v1219 = vand.u32 %v1147, 4294901760
        %v1220 = vsub.f32 %v1147, %v1219
        %v1221 = vand.u32 %v1220, 4294901760
        %v1222 = vsub.f32 %v1220, %v1221
        %v1223 = vand.u32 %v1222, 4294901760
        %1224 = vmatmul.mubr.f32.gmra.mxu0 %v1223
        %v1225 = vpop.f32.mrf.mxu0
        %v1226 = vadd.f32 0.0, %v1225
        %v1227 = vpop.f32.mrf.mxu0
        %1228 = vdwg.mxu0
        %1229 = vmatprep.subr.mxu0 0.0
        %1230 = vmatpush1.msra.mxu0 0.0
        %1231 = vmatprep.subr.mxu0 0.0
        %1232 = vmatpush1.msra.mxu0 0.0
        %1233 = vmatprep.subr.mxu0 0.0
        %1234 = vmatpush1.msra.mxu0 0.0
        %1235 = vmatprep.subr.mxu0 0.0
        %1236 = vmatpush1.msra.mxu0 0.0
        %1237 = vmatprep.subr.mxu0 0.0
        %1238 = vmatpush1.msra.mxu0 0.0
        %1239 = vmatprep.subr.mxu0 0.0
        %1240 = vmatpush1.msra.mxu0 0.0
        %1241 = vmatprep.subr.mxu0 0.0
        %1242 = vmatpush1.msra.mxu0 0.0
        %1243 = vmatprep.subr.mxu0 0.0
        %1244 = vmatpush1.msra.mxu0 0.0
        %1245 = vmatprep.subr.mxu0 0.0
        %1246 = vmatpush1.msra.mxu0 0.0
        %1247 = vmatprep.subr.mxu0 0.0
        %1248 = vmatpush1.msra.mxu0 0.0
        %1249 = vmatprep.subr.mxu0 0.0
        %1250 = vmatpush1.msra.mxu0 0.0
        %1251 = vmatprep.subr.mxu0 0.0
        %1252 = vmatpush1.msra.mxu0 0.0
        %1253 = vmatprep.subr.mxu0 0.0
        %1254 = vmatpush1.msra.mxu0 0.0
        %1255 = vmatprep.subr.mxu0 0.0
        %1256 = vmatpush1.msra.mxu0 0.0
        %1257 = vmatprep.subr.mxu0 0.0
        %1258 = vmatpush1.msra.mxu0 0.0
        %1259 = vmatprep.subr.mxu0 0.0
        %1260 = vmatpush1.msra.mxu0 0.0
        %1261 = vmatprep.subr.mxu0 0.0
        %1262 = vmatpush2.msra.mxu0 0.0
        %1263 = vmatprep.subr.mxu0 0.0
        %1264 = vmatpush2.msra.mxu0 0.0
        %1265 = vmatprep.subr.mxu0 0.0
        %1266 = vmatpush2.msra.mxu0 0.0
        %1267 = vmatprep.subr.mxu0 0.0
        %1268 = vmatpush2.msra.mxu0 0.0
        %1269 = vmatprep.subr.mxu0 0.0
        %1270 = vmatpush2.msra.mxu0 0.0
        %1271 = vmatprep.subr.mxu0 0.0
        %1272 = vmatpush2.msra.mxu0 0.0
        %1273 = vmatprep.subr.mxu0 0.0
        %1274 = vmatpush2.msra.mxu0 0.0
        %1275 = vmatprep.subr.mxu0 0.0
        %1276 = vmatpush2.msra.mxu0 0.0
        %1277 = vmatprep.subr.mxu0 0.0
        %1278 = vmatpush2.msra.mxu0 0.0
        %1279 = vmatprep.subr.mxu0 0.0
        %1280 = vmatpush2.msra.mxu0 0.0
        %1281 = vmatprep.subr.mxu0 0.0
        %1282 = vmatpush2.msra.mxu0 0.0
        %1283 = vmatprep.subr.mxu0 0.0
        %1284 = vmatpush2.msra.mxu0 0.0
        %1285 = vmatprep.subr.mxu0 0.0
        %1286 = vmatpush2.msra.mxu0 0.0
        %1287 = vmatprep.subr.mxu0 0.0
        %1288 = vmatpush2.msra.mxu0 0.0
        %1289 = vmatprep.subr.mxu0 0.0
        %1290 = vmatpush2.msra.mxu0 0.0
        %1291 = vmatprep.subr.mxu0 0.0
        %1292 = vmatpush2.msra.mxu0 0.0
        %1293 = vmatprep.mubr.f32.mxu0 0.0
        %v1294 = vand.u32 %v1147, 4294901760
        %1295 = vmatmul.mubr.f32.gmra.mxu0 %v1294
        %v1296 = vpop.f32.mrf.mxu0
        %v1297 = vadd.f32 %v1226, %v1296
        %v1298 = vpop.f32.mrf.mxu0
        %1299 = vdwg.mxu0
        %1300 = vmatprep.subr.mxu0 0.0
        %1301 = vmatpush1.msra.mxu0 0.0
        %1302 = vmatprep.subr.mxu0 0.0
        %1303 = vmatpush1.msra.mxu0 0.0
        %1304 = vmatprep.subr.mxu0 0.0
        %1305 = vmatpush1.msra.mxu0 0.0
        %1306 = vmatprep.subr.mxu0 0.0
        %1307 = vmatpush1.msra.mxu0 0.0
        %1308 = vmatprep.subr.mxu0 0.0
        %1309 = vmatpush1.msra.mxu0 0.0
        %1310 = vmatprep.subr.mxu0 0.0
        %1311 = vmatpush1.msra.mxu0 0.0
        %1312 = vmatprep.subr.mxu0 0.0
        %1313 = vmatpush1.msra.mxu0 0.0
        %1314 = vmatprep.subr.mxu0 0.0
        %1315 = vmatpush1.msra.mxu0 0.0
        %1316 = vmatprep.subr.mxu0 0.0
        %1317 = vmatpush1.msra.mxu0 0.0
        %1318 = vmatprep.subr.mxu0 0.0
        %1319 = vmatpush1.msra.mxu0 0.0
        %1320 = vmatprep.subr.mxu0 0.0
        %1321 = vmatpush1.msra.mxu0 0.0
        %1322 = vmatprep.subr.mxu0 0.0
        %1323 = vmatpush1.msra.mxu0 0.0
        %1324 = vmatprep.subr.mxu0 0.0
        %1325 = vmatpush1.msra.mxu0 0.0
        %1326 = vmatprep.subr.mxu0 0.0
        %1327 = vmatpush1.msra.mxu0 0.0
        %1328 = vmatprep.subr.mxu0 0.0
        %1329 = vmatpush1.msra.mxu0 0.0
        %1330 = vmatprep.subr.mxu0 0.0
        %1331 = vmatpush1.msra.mxu0 0.0
        %1332 = vmatprep.subr.mxu0 0.0
        %1333 = vmatpush2.msra.mxu0 0.0
        %1334 = vmatprep.subr.mxu0 0.0
        %1335 = vmatpush2.msra.mxu0 0.0
        %1336 = vmatprep.subr.mxu0 0.0
        %1337 = vmatpush2.msra.mxu0 0.0
        %1338 = vmatprep.subr.mxu0 0.0
        %1339 = vmatpush2.msra.mxu0 0.0
        %1340 = vmatprep.subr.mxu0 0.0
        %1341 = vmatpush2.msra.mxu0 0.0
        %1342 = vmatprep.subr.mxu0 0.0
        %1343 = vmatpush2.msra.mxu0 0.0
        %1344 = vmatprep.subr.mxu0 0.0
        %1345 = vmatpush2.msra.mxu0 0.0
        %1346 = vmatprep.subr.mxu0 0.0
        %1347 = vmatpush2.msra.mxu0 0.0
        %1348 = vmatprep.subr.mxu0 0.0
        %1349 = vmatpush2.msra.mxu0 0.0
        %1350 = vmatprep.subr.mxu0 0.0
        %1351 = vmatpush2.msra.mxu0 0.0
        %1352 = vmatprep.subr.mxu0 0.0
        %1353 = vmatpush2.msra.mxu0 0.0
        %1354 = vmatprep.subr.mxu0 0.0
        %1355 = vmatpush2.msra.mxu0 0.0
        %1356 = vmatprep.subr.mxu0 0.0
        %1357 = vmatpush2.msra.mxu0 0.0
        %1358 = vmatprep.subr.mxu0 0.0
        %1359 = vmatpush2.msra.mxu0 0.0
        %1360 = vmatprep.subr.mxu0 0.0
        %1361 = vmatpush2.msra.mxu0 0.0
        %1362 = vmatprep.subr.mxu0 0.0
        %1363 = vmatpush2.msra.mxu0 0.0
        %1364 = vmatprep.mubr.f32.mxu0 0.0
        %v1365 = vand.u32 %v1147, 4294901760
        %v1366 = vsub.f32 %v1147, %v1365
        %1367 = vmatmul.mubr.f32.gmra.mxu0 %v1366
        %v1368 = vpop.f32.mrf.mxu0
        %v1369 = vadd.f32 %v1297, %v1368
        %v1370 = vpop.f32.mrf.mxu0
        %1371 = vdwg.mxu0
        %1372 = vmatprep.subr.mxu0 0.0
        %1373 = vmatpush1.msra.mxu0 1.0
        %1374 = vmatprep.subr.mxu0 0.0
        %1375 = vmatpush1.msra.mxu0 1.0
        %1376 = vmatprep.subr.mxu0 0.0
        %1377 = vmatpush1.msra.mxu0 1.0
        %1378 = vmatprep.subr.mxu0 0.0
        %1379 = vmatpush1.msra.mxu0 1.0
        %1380 = vmatprep.subr.mxu0 0.0
        %1381 = vmatpush1.msra.mxu0 1.0
        %1382 = vmatprep.subr.mxu0 0.0
        %1383 = vmatpush1.msra.mxu0 1.0
        %1384 = vmatprep.subr.mxu0 0.0
        %1385 = vmatpush1.msra.mxu0 1.0
        %1386 = vmatprep.subr.mxu0 0.0
        %1387 = vmatpush1.msra.mxu0 1.0
        %1388 = vmatprep.subr.mxu0 0.0
        %1389 = vmatpush1.msra.mxu0 1.0
        %1390 = vmatprep.subr.mxu0 0.0
        %1391 = vmatpush1.msra.mxu0 1.0
        %1392 = vmatprep.subr.mxu0 0.0
        %1393 = vmatpush1.msra.mxu0 1.0
        %1394 = vmatprep.subr.mxu0 0.0
        %1395 = vmatpush1.msra.mxu0 1.0
        %1396 = vmatprep.subr.mxu0 0.0
        %1397 = vmatpush1.msra.mxu0 1.0
        %1398 = vmatprep.subr.mxu0 0.0
        %1399 = vmatpush1.msra.mxu0 1.0
        %1400 = vmatprep.subr.mxu0 0.0
        %1401 = vmatpush1.msra.mxu0 1.0
        %1402 = vmatprep.subr.mxu0 0.0
        %1403 = vmatpush1.msra.mxu0 1.0
        %1404 = vmatprep.subr.mxu0 0.0
        %1405 = vmatpush2.msra.mxu0 0.0
        %1406 = vmatprep.subr.mxu0 0.0
        %1407 = vmatpush2.msra.mxu0 0.0
        %1408 = vmatprep.subr.mxu0 0.0
        %1409 = vmatpush2.msra.mxu0 0.0
        %1410 = vmatprep.subr.mxu0 0.0
        %1411 = vmatpush2.msra.mxu0 0.0
        %1412 = vmatprep.subr.mxu0 0.0
        %1413 = vmatpush2.msra.mxu0 0.0
        %1414 = vmatprep.subr.mxu0 0.0
        %1415 = vmatpush2.msra.mxu0 0.0
        %1416 = vmatprep.subr.mxu0 0.0
        %1417 = vmatpush2.msra.mxu0 0.0
        %1418 = vmatprep.subr.mxu0 0.0
        %1419 = vmatpush2.msra.mxu0 0.0
        %1420 = vmatprep.subr.mxu0 0.0
        %1421 = vmatpush2.msra.mxu0 0.0
        %1422 = vmatprep.subr.mxu0 0.0
        %1423 = vmatpush2.msra.mxu0 0.0
        %1424 = vmatprep.subr.mxu0 0.0
        %1425 = vmatpush2.msra.mxu0 0.0
        %1426 = vmatprep.subr.mxu0 0.0
        %1427 = vmatpush2.msra.mxu0 0.0
        %1428 = vmatprep.subr.mxu0 0.0
        %1429 = vmatpush2.msra.mxu0 0.0
        %1430 = vmatprep.subr.mxu0 0.0
        %1431 = vmatpush2.msra.mxu0 0.0
        %1432 = vmatprep.subr.mxu0 0.0
        %1433 = vmatpush2.msra.mxu0 0.0
        %1434 = vmatprep.subr.mxu0 0.0
        %1435 = vmatpush2.msra.mxu0 0.0
        %1436 = vmatprep.mubr.f32.mxu0 0.0
        %v1437 = vand.u32 %v1147, 4294901760
        %v1438 = vsub.f32 %v1147, %v1437
        %v1439 = vand.u32 %v1438, 4294901760
        %1440 = vmatmul.mubr.f32.gmra.mxu0 %v1439
        %v1441 = vpop.f32.mrf.mxu0
        %v1442 = vadd.f32 %v1369, %v1441
        %v1443 = vpop.f32.mrf.mxu0
        %1444 = vdwg.mxu0
        %1445 = vmatprep.subr.mxu0 0.0
        %1446 = vmatpush1.msra.mxu0 0.0
        %1447 = vmatprep.subr.mxu0 0.0
        %1448 = vmatpush1.msra.mxu0 0.0
        %1449 = vmatprep.subr.mxu0 0.0
        %1450 = vmatpush1.msra.mxu0 0.0
        %1451 = vmatprep.subr.mxu0 0.0
        %1452 = vmatpush1.msra.mxu0 0.0
        %1453 = vmatprep.subr.mxu0 0.0
        %1454 = vmatpush1.msra.mxu0 0.0
        %1455 = vmatprep.subr.mxu0 0.0
        %1456 = vmatpush1.msra.mxu0 0.0
        %1457 = vmatprep.subr.mxu0 0.0
        %1458 = vmatpush1.msra.mxu0 0.0
        %1459 = vmatprep.subr.mxu0 0.0
        %1460 = vmatpush1.msra.mxu0 0.0
        %1461 = vmatprep.subr.mxu0 0.0
        %1462 = vmatpush1.msra.mxu0 0.0
        %1463 = vmatprep.subr.mxu0 0.0
        %1464 = vmatpush1.msra.mxu0 0.0
        %1465 = vmatprep.subr.mxu0 0.0
        %1466 = vmatpush1.msra.mxu0 0.0
        %1467 = vmatprep.subr.mxu0 0.0
        %1468 = vmatpush1.msra.mxu0 0.0
        %1469 = vmatprep.subr.mxu0 0.0
        %1470 = vmatpush1.msra.mxu0 0.0
        %1471 = vmatprep.subr.mxu0 0.0
        %1472 = vmatpush1.msra.mxu0 0.0
        %1473 = vmatprep.subr.mxu0 0.0
        %1474 = vmatpush1.msra.mxu0 0.0
        %1475 = vmatprep.subr.mxu0 0.0
        %1476 = vmatpush1.msra.mxu0 0.0
        %1477 = vmatprep.subr.mxu0 0.0
        %1478 = vmatpush2.msra.mxu0 0.0
        %1479 = vmatprep.subr.mxu0 0.0
        %1480 = vmatpush2.msra.mxu0 0.0
        %1481 = vmatprep.subr.mxu0 0.0
        %1482 = vmatpush2.msra.mxu0 0.0
        %1483 = vmatprep.subr.mxu0 0.0
        %1484 = vmatpush2.msra.mxu0 0.0
        %1485 = vmatprep.subr.mxu0 0.0
        %1486 = vmatpush2.msra.mxu0 0.0
        %1487 = vmatprep.subr.mxu0 0.0
        %1488 = vmatpush2.msra.mxu0 0.0
        %1489 = vmatprep.subr.mxu0 0.0
        %1490 = vmatpush2.msra.mxu0 0.0
        %1491 = vmatprep.subr.mxu0 0.0
        %1492 = vmatpush2.msra.mxu0 0.0
        %1493 = vmatprep.subr.mxu0 0.0
        %1494 = vmatpush2.msra.mxu0 0.0
        %1495 = vmatprep.subr.mxu0 0.0
        %1496 = vmatpush2.msra.mxu0 0.0
        %1497 = vmatprep.subr.mxu0 0.0
        %1498 = vmatpush2.msra.mxu0 0.0
        %1499 = vmatprep.subr.mxu0 0.0
        %1500 = vmatpush2.msra.mxu0 0.0
        %1501 = vmatprep.subr.mxu0 0.0
        %1502 = vmatpush2.msra.mxu0 0.0
        %1503 = vmatprep.subr.mxu0 0.0
        %1504 = vmatpush2.msra.mxu0 0.0
        %1505 = vmatprep.subr.mxu0 0.0
        %1506 = vmatpush2.msra.mxu0 0.0
        %1507 = vmatprep.subr.mxu0 0.0
        %1508 = vmatpush2.msra.mxu0 0.0
        %1509 = vmatprep.mubr.f32.mxu0 0.0
        %v1510 = vand.u32 %v1147, 4294901760
        %1511 = vmatmul.mubr.f32.gmra.mxu0 %v1510
        %v1512 = vpop.f32.mrf.mxu0
        %v1513 = vadd.f32 %v1442, %v1512
        %v1514 = vpop.f32.mrf.mxu0
        %1515 = vdwg.mxu0
        %1516 = vmatprep.subr.mxu0 0.0
        %1517 = vmatpush1.msra.mxu0 1.0
        %1518 = vmatprep.subr.mxu0 0.0
        %1519 = vmatpush1.msra.mxu0 1.0
        %1520 = vmatprep.subr.mxu0 0.0
        %1521 = vmatpush1.msra.mxu0 1.0
        %1522 = vmatprep.subr.mxu0 0.0
        %1523 = vmatpush1.msra.mxu0 1.0
        %1524 = vmatprep.subr.mxu0 0.0
        %1525 = vmatpush1.msra.mxu0 1.0
        %1526 = vmatprep.subr.mxu0 0.0
        %1527 = vmatpush1.msra.mxu0 1.0
        %1528 = vmatprep.subr.mxu0 0.0
        %1529 = vmatpush1.msra.mxu0 1.0
        %1530 = vmatprep.subr.mxu0 0.0
        %1531 = vmatpush1.msra.mxu0 1.0
        %1532 = vmatprep.subr.mxu0 0.0
        %1533 = vmatpush1.msra.mxu0 1.0
        %1534 = vmatprep.subr.mxu0 0.0
        %1535 = vmatpush1.msra.mxu0 1.0
        %1536 = vmatprep.subr.mxu0 0.0
        %1537 = vmatpush1.msra.mxu0 1.0
        %1538 = vmatprep.subr.mxu0 0.0
        %1539 = vmatpush1.msra.mxu0 1.0
        %1540 = vmatprep.subr.mxu0 0.0
        %1541 = vmatpush1.msra.mxu0 1.0
        %1542 = vmatprep.subr.mxu0 0.0
        %1543 = vmatpush1.msra.mxu0 1.0
        %1544 = vmatprep.subr.mxu0 0.0
        %1545 = vmatpush1.msra.mxu0 1.0
        %1546 = vmatprep.subr.mxu0 0.0
        %1547 = vmatpush1.msra.mxu0 1.0
        %1548 = vmatprep.subr.mxu0 0.0
        %1549 = vmatpush2.msra.mxu0 0.0
        %1550 = vmatprep.subr.mxu0 0.0
        %1551 = vmatpush2.msra.mxu0 0.0
        %1552 = vmatprep.subr.mxu0 0.0
        %1553 = vmatpush2.msra.mxu0 0.0
        %1554 = vmatprep.subr.mxu0 0.0
        %1555 = vmatpush2.msra.mxu0 0.0
        %1556 = vmatprep.subr.mxu0 0.0
        %1557 = vmatpush2.msra.mxu0 0.0
        %1558 = vmatprep.subr.mxu0 0.0
        %1559 = vmatpush2.msra.mxu0 0.0
        %1560 = vmatprep.subr.mxu0 0.0
        %1561 = vmatpush2.msra.mxu0 0.0
        %1562 = vmatprep.subr.mxu0 0.0
        %1563 = vmatpush2.msra.mxu0 0.0
        %1564 = vmatprep.subr.mxu0 0.0
        %1565 = vmatpush2.msra.mxu0 0.0
        %1566 = vmatprep.subr.mxu0 0.0
        %1567 = vmatpush2.msra.mxu0 0.0
        %1568 = vmatprep.subr.mxu0 0.0
        %1569 = vmatpush2.msra.mxu0 0.0
        %1570 = vmatprep.subr.mxu0 0.0
        %1571 = vmatpush2.msra.mxu0 0.0
        %1572 = vmatprep.subr.mxu0 0.0
        %1573 = vmatpush2.msra.mxu0 0.0
        %1574 = vmatprep.subr.mxu0 0.0
        %1575 = vmatpush2.msra.mxu0 0.0
        %1576 = vmatprep.subr.mxu0 0.0
        %1577 = vmatpush2.msra.mxu0 0.0
        %1578 = vmatprep.subr.mxu0 0.0
        %1579 = vmatpush2.msra.mxu0 0.0
        %1580 = vmatprep.mubr.f32.mxu0 0.0
        %v1581 = vand.u32 %v1147, 4294901760
        %1582 = vmatmul.mubr.f32.gmra.mxu0 %v1581
        %v1583 = vpop.f32.mrf.mxu0
        %v1584 = vadd.f32 %v1513, %v1583
        %v1585 = vpop.f32.mrf.mxu0
        %1586 = vdwg.mxu0
        %1587 = vmatprep.subr.mxu0 0.0
        %1588 = vmatpush1.msra.mxu0 1.0
        %1589 = vmatprep.subr.mxu0 0.0
        %1590 = vmatpush1.msra.mxu0 1.0
        %1591 = vmatprep.subr.mxu0 0.0
        %1592 = vmatpush1.msra.mxu0 1.0
        %1593 = vmatprep.subr.mxu0 0.0
        %1594 = vmatpush1.msra.mxu0 1.0
        %1595 = vmatprep.subr.mxu0 0.0
        %1596 = vmatpush1.msra.mxu0 1.0
        %1597 = vmatprep.subr.mxu0 0.0
        %1598 = vmatpush1.msra.mxu0 1.0
        %1599 = vmatprep.subr.mxu0 0.0
        %1600 = vmatpush1.msra.mxu0 1.0
        %1601 = vmatprep.subr.mxu0 0.0
        %1602 = vmatpush1.msra.mxu0 1.0
        %1603 = vmatprep.subr.mxu0 0.0
        %1604 = vmatpush1.msra.mxu0 1.0
        %1605 = vmatprep.subr.mxu0 0.0
        %1606 = vmatpush1.msra.mxu0 1.0
        %1607 = vmatprep.subr.mxu0 0.0
        %1608 = vmatpush1.msra.mxu0 1.0
        %1609 = vmatprep.subr.mxu0 0.0
        %1610 = vmatpush1.msra.mxu0 1.0
        %1611 = vmatprep.subr.mxu0 0.0
        %1612 = vmatpush1.msra.mxu0 1.0
        %1613 = vmatprep.subr.mxu0 0.0
        %1614 = vmatpush1.msra.mxu0 1.0
        %1615 = vmatprep.subr.mxu0 0.0
        %1616 = vmatpush1.msra.mxu0 1.0
        %1617 = vmatprep.subr.mxu0 0.0
        %1618 = vmatpush1.msra.mxu0 1.0
        %1619 = vmatprep.subr.mxu0 0.0
        %1620 = vmatpush2.msra.mxu0 0.0
        %1621 = vmatprep.subr.mxu0 0.0
        %1622 = vmatpush2.msra.mxu0 0.0
        %1623 = vmatprep.subr.mxu0 0.0
        %1624 = vmatpush2.msra.mxu0 0.0
        %1625 = vmatprep.subr.mxu0 0.0
        %1626 = vmatpush2.msra.mxu0 0.0
        %1627 = vmatprep.subr.mxu0 0.0
        %1628 = vmatpush2.msra.mxu0 0.0
        %1629 = vmatprep.subr.mxu0 0.0
        %1630 = vmatpush2.msra.mxu0 0.0
        %1631 = vmatprep.subr.mxu0 0.0
        %1632 = vmatpush2.msra.mxu0 0.0
        %1633 = vmatprep.subr.mxu0 0.0
        %1634 = vmatpush2.msra.mxu0 0.0
        %1635 = vmatprep.subr.mxu0 0.0
        %1636 = vmatpush2.msra.mxu0 0.0
        %1637 = vmatprep.subr.mxu0 0.0
        %1638 = vmatpush2.msra.mxu0 0.0
        %1639 = vmatprep.subr.mxu0 0.0
        %1640 = vmatpush2.msra.mxu0 0.0
        %1641 = vmatprep.subr.mxu0 0.0
        %1642 = vmatpush2.msra.mxu0 0.0
        %1643 = vmatprep.subr.mxu0 0.0
        %1644 = vmatpush2.msra.mxu0 0.0
        %1645 = vmatprep.subr.mxu0 0.0
        %1646 = vmatpush2.msra.mxu0 0.0
        %1647 = vmatprep.subr.mxu0 0.0
        %1648 = vmatpush2.msra.mxu0 0.0
        %1649 = vmatprep.subr.mxu0 0.0
        %1650 = vmatpush2.msra.mxu0 0.0
        %1651 = vmatprep.mubr.f32.mxu0 0.0
        %v1652 = vand.u32 %v1153, 4294901760
        %v1653 = vsub.f32 %v1153, %v1652
        %v1654 = vand.u32 %v1653, 4294901760
        %v1655 = vsub.f32 %v1653, %v1654
        %v1656 = vand.u32 %v1655, 4294901760
        %1657 = vmatmul.mubr.f32.gmra.mxu0 %v1656
        %v1658 = vpop.f32.mrf.mxu0
        %v1659 = vadd.f32 0.0, %v1658
        %v1660 = vpop.f32.mrf.mxu0
        %1661 = vdwg.mxu0
        %1662 = vmatprep.subr.mxu0 0.0
        %1663 = vmatpush1.msra.mxu0 0.0
        %1664 = vmatprep.subr.mxu0 0.0
        %1665 = vmatpush1.msra.mxu0 0.0
        %1666 = vmatprep.subr.mxu0 0.0
        %1667 = vmatpush1.msra.mxu0 0.0
        %1668 = vmatprep.subr.mxu0 0.0
        %1669 = vmatpush1.msra.mxu0 0.0
        %1670 = vmatprep.subr.mxu0 0.0
        %1671 = vmatpush1.msra.mxu0 0.0
        %1672 = vmatprep.subr.mxu0 0.0
        %1673 = vmatpush1.msra.mxu0 0.0
        %1674 = vmatprep.subr.mxu0 0.0
        %1675 = vmatpush1.msra.mxu0 0.0
        %1676 = vmatprep.subr.mxu0 0.0
        %1677 = vmatpush1.msra.mxu0 0.0
        %1678 = vmatprep.subr.mxu0 0.0
        %1679 = vmatpush1.msra.mxu0 0.0
        %1680 = vmatprep.subr.mxu0 0.0
        %1681 = vmatpush1.msra.mxu0 0.0
        %1682 = vmatprep.subr.mxu0 0.0
        %1683 = vmatpush1.msra.mxu0 0.0
        %1684 = vmatprep.subr.mxu0 0.0
        %1685 = vmatpush1.msra.mxu0 0.0
        %1686 = vmatprep.subr.mxu0 0.0
        %1687 = vmatpush1.msra.mxu0 0.0
        %1688 = vmatprep.subr.mxu0 0.0
        %1689 = vmatpush1.msra.mxu0 0.0
        %1690 = vmatprep.subr.mxu0 0.0
        %1691 = vmatpush1.msra.mxu0 0.0
        %1692 = vmatprep.subr.mxu0 0.0
        %1693 = vmatpush1.msra.mxu0 0.0
        %1694 = vmatprep.subr.mxu0 0.0
        %1695 = vmatpush2.msra.mxu0 0.0
        %1696 = vmatprep.subr.mxu0 0.0
        %1697 = vmatpush2.msra.mxu0 0.0
        %1698 = vmatprep.subr.mxu0 0.0
        %1699 = vmatpush2.msra.mxu0 0.0
        %1700 = vmatprep.subr.mxu0 0.0
        %1701 = vmatpush2.msra.mxu0 0.0
        %1702 = vmatprep.subr.mxu0 0.0
        %1703 = vmatpush2.msra.mxu0 0.0
        %1704 = vmatprep.subr.mxu0 0.0
        %1705 = vmatpush2.msra.mxu0 0.0
        %1706 = vmatprep.subr.mxu0 0.0
        %1707 = vmatpush2.msra.mxu0 0.0
        %1708 = vmatprep.subr.mxu0 0.0
        %1709 = vmatpush2.msra.mxu0 0.0
        %1710 = vmatprep.subr.mxu0 0.0
        %1711 = vmatpush2.msra.mxu0 0.0
        %1712 = vmatprep.subr.mxu0 0.0
        %1713 = vmatpush2.msra.mxu0 0.0
        %1714 = vmatprep.subr.mxu0 0.0
        %1715 = vmatpush2.msra.mxu0 0.0
        %1716 = vmatprep.subr.mxu0 0.0
        %1717 = vmatpush2.msra.mxu0 0.0
        %1718 = vmatprep.subr.mxu0 0.0
        %1719 = vmatpush2.msra.mxu0 0.0
        %1720 = vmatprep.subr.mxu0 0.0
        %1721 = vmatpush2.msra.mxu0 0.0
        %1722 = vmatprep.subr.mxu0 0.0
        %1723 = vmatpush2.msra.mxu0 0.0
        %1724 = vmatprep.subr.mxu0 0.0
        %1725 = vmatpush2.msra.mxu0 0.0
        %1726 = vmatprep.mubr.f32.mxu0 0.0
        %v1727 = vand.u32 %v1153, 4294901760
        %1728 = vmatmul.mubr.f32.gmra.mxu0 %v1727
        %v1729 = vpop.f32.mrf.mxu0
        %v1730 = vadd.f32 %v1659, %v1729
        %v1731 = vpop.f32.mrf.mxu0
        %1732 = vdwg.mxu0
        %1733 = vmatprep.subr.mxu0 0.0
        %1734 = vmatpush1.msra.mxu0 0.0
        %1735 = vmatprep.subr.mxu0 0.0
        %1736 = vmatpush1.msra.mxu0 0.0
        %1737 = vmatprep.subr.mxu0 0.0
        %1738 = vmatpush1.msra.mxu0 0.0
        %1739 = vmatprep.subr.mxu0 0.0
        %1740 = vmatpush1.msra.mxu0 0.0
        %1741 = vmatprep.subr.mxu0 0.0
        %1742 = vmatpush1.msra.mxu0 0.0
        %1743 = vmatprep.subr.mxu0 0.0
        %1744 = vmatpush1.msra.mxu0 0.0
        %1745 = vmatprep.subr.mxu0 0.0
        %1746 = vmatpush1.msra.mxu0 0.0
        %1747 = vmatprep.subr.mxu0 0.0
        %1748 = vmatpush1.msra.mxu0 0.0
        %1749 = vmatprep.subr.mxu0 0.0
        %1750 = vmatpush1.msra.mxu0 0.0
        %1751 = vmatprep.subr.mxu0 0.0
        %1752 = vmatpush1.msra.mxu0 0.0
        %1753 = vmatprep.subr.mxu0 0.0
        %1754 = vmatpush1.msra.mxu0 0.0
        %1755 = vmatprep.subr.mxu0 0.0
        %1756 = vmatpush1.msra.mxu0 0.0
        %1757 = vmatprep.subr.mxu0 0.0
        %1758 = vmatpush1.msra.mxu0 0.0
        %1759 = vmatprep.subr.mxu0 0.0
        %1760 = vmatpush1.msra.mxu0 0.0
        %1761 = vmatprep.subr.mxu0 0.0
        %1762 = vmatpush1.msra.mxu0 0.0
        %1763 = vmatprep.subr.mxu0 0.0
        %1764 = vmatpush1.msra.mxu0 0.0
        %1765 = vmatprep.subr.mxu0 0.0
        %1766 = vmatpush2.msra.mxu0 0.0
        %1767 = vmatprep.subr.mxu0 0.0
        %1768 = vmatpush2.msra.mxu0 0.0
        %1769 = vmatprep.subr.mxu0 0.0
        %1770 = vmatpush2.msra.mxu0 0.0
        %1771 = vmatprep.subr.mxu0 0.0
        %1772 = vmatpush2.msra.mxu0 0.0
        %1773 = vmatprep.subr.mxu0 0.0
        %1774 = vmatpush2.msra.mxu0 0.0
        %1775 = vmatprep.subr.mxu0 0.0
        %1776 = vmatpush2.msra.mxu0 0.0
        %1777 = vmatprep.subr.mxu0 0.0
        %1778 = vmatpush2.msra.mxu0 0.0
        %1779 = vmatprep.subr.mxu0 0.0
        %1780 = vmatpush2.msra.mxu0 0.0
        %1781 = vmatprep.subr.mxu0 0.0
        %1782 = vmatpush2.msra.mxu0 0.0
        %1783 = vmatprep.subr.mxu0 0.0
        %1784 = vmatpush2.msra.mxu0 0.0
        %1785 = vmatprep.subr.mxu0 0.0
        %1786 = vmatpush2.msra.mxu0 0.0
        %1787 = vmatprep.subr.mxu0 0.0
        %1788 = vmatpush2.msra.mxu0 0.0
        %1789 = vmatprep.subr.mxu0 0.0
        %1790 = vmatpush2.msra.mxu0 0.0
        %1791 = vmatprep.subr.mxu0 0.0
        %1792 = vmatpush2.msra.mxu0 0.0
        %1793 = vmatprep.subr.mxu0 0.0
        %1794 = vmatpush2.msra.mxu0 0.0
        %1795 = vmatprep.subr.mxu0 0.0
        %1796 = vmatpush2.msra.mxu0 0.0
        %1797 = vmatprep.mubr.f32.mxu0 0.0
        %v1798 = vand.u32 %v1153, 4294901760
        %v1799 = vsub.f32 %v1153, %v1798
        %1800 = vmatmul.mubr.f32.gmra.mxu0 %v1799
        %v1801 = vpop.f32.mrf.mxu0
        %v1802 = vadd.f32 %v1730, %v1801
        %v1803 = vpop.f32.mrf.mxu0
        %1804 = vdwg.mxu0
        %1805 = vmatprep.subr.mxu0 0.0
        %1806 = vmatpush1.msra.mxu0 1.0
        %1807 = vmatprep.subr.mxu0 0.0
        %1808 = vmatpush1.msra.mxu0 1.0
        %1809 = vmatprep.subr.mxu0 0.0
        %1810 = vmatpush1.msra.mxu0 1.0
        %1811 = vmatprep.subr.mxu0 0.0
        %1812 = vmatpush1.msra.mxu0 1.0
        %1813 = vmatprep.subr.mxu0 0.0
        %1814 = vmatpush1.msra.mxu0 1.0
        %1815 = vmatprep.subr.mxu0 0.0
        %1816 = vmatpush1.msra.mxu0 1.0
        %1817 = vmatprep.subr.mxu0 0.0
        %1818 = vmatpush1.msra.mxu0 1.0
        %1819 = vmatprep.subr.mxu0 0.0
        %1820 = vmatpush1.msra.mxu0 1.0
        %1821 = vmatprep.subr.mxu0 0.0
        %1822 = vmatpush1.msra.mxu0 1.0
        %1823 = vmatprep.subr.mxu0 0.0
        %1824 = vmatpush1.msra.mxu0 1.0
        %1825 = vmatprep.subr.mxu0 0.0
        %1826 = vmatpush1.msra.mxu0 1.0
        %1827 = vmatprep.subr.mxu0 0.0
        %1828 = vmatpush1.msra.mxu0 1.0
        %1829 = vmatprep.subr.mxu0 0.0
        %1830 = vmatpush1.msra.mxu0 1.0
        %1831 = vmatprep.subr.mxu0 0.0
        %1832 = vmatpush1.msra.mxu0 1.0
        %1833 = vmatprep.subr.mxu0 0.0
        %1834 = vmatpush1.msra.mxu0 1.0
        %1835 = vmatprep.subr.mxu0 0.0
        %1836 = vmatpush1.msra.mxu0 1.0
        %1837 = vmatprep.subr.mxu0 0.0
        %1838 = vmatpush2.msra.mxu0 0.0
        %1839 = vmatprep.subr.mxu0 0.0
        %1840 = vmatpush2.msra.mxu0 0.0
        %1841 = vmatprep.subr.mxu0 0.0
        %1842 = vmatpush2.msra.mxu0 0.0
        %1843 = vmatprep.subr.mxu0 0.0
        %1844 = vmatpush2.msra.mxu0 0.0
        %1845 = vmatprep.subr.mxu0 0.0
        %1846 = vmatpush2.msra.mxu0 0.0
        %1847 = vmatprep.subr.mxu0 0.0
        %1848 = vmatpush2.msra.mxu0 0.0
        %1849 = vmatprep.subr.mxu0 0.0
        %1850 = vmatpush2.msra.mxu0 0.0
        %1851 = vmatprep.subr.mxu0 0.0
        %1852 = vmatpush2.msra.mxu0 0.0
        %1853 = vmatprep.subr.mxu0 0.0
        %1854 = vmatpush2.msra.mxu0 0.0
        %1855 = vmatprep.subr.mxu0 0.0
        %1856 = vmatpush2.msra.mxu0 0.0
        %1857 = vmatprep.subr.mxu0 0.0
        %1858 = vmatpush2.msra.mxu0 0.0
        %1859 = vmatprep.subr.mxu0 0.0
        %1860 = vmatpush2.msra.mxu0 0.0
        %1861 = vmatprep.subr.mxu0 0.0
        %1862 = vmatpush2.msra.mxu0 0.0
        %1863 = vmatprep.subr.mxu0 0.0
        %1864 = vmatpush2.msra.mxu0 0.0
        %1865 = vmatprep.subr.mxu0 0.0
        %1866 = vmatpush2.msra.mxu0 0.0
        %1867 = vmatprep.subr.mxu0 0.0
        %1868 = vmatpush2.msra.mxu0 0.0
        %1869 = vmatprep.mubr.f32.mxu0 0.0
        %v1870 = vand.u32 %v1153, 4294901760
        %v1871 = vsub.f32 %v1153, %v1870
        %v1872 = vand.u32 %v1871, 4294901760
        %1873 = vmatmul.mubr.f32.gmra.mxu0 %v1872
        %v1874 = vpop.f32.mrf.mxu0
        %v1875 = vadd.f32 %v1802, %v1874
        %v1876 = vpop.f32.mrf.mxu0
        %1877 = vdwg.mxu0
        %1878 = vmatprep.subr.mxu0 0.0
        %1879 = vmatpush1.msra.mxu0 0.0
        %1880 = vmatprep.subr.mxu0 0.0
        %1881 = vmatpush1.msra.mxu0 0.0
        %1882 = vmatprep.subr.mxu0 0.0
        %1883 = vmatpush1.msra.mxu0 0.0
        %1884 = vmatprep.subr.mxu0 0.0
        %1885 = vmatpush1.msra.mxu0 0.0
        %1886 = vmatprep.subr.mxu0 0.0
        %1887 = vmatpush1.msra.mxu0 0.0
        %1888 = vmatprep.subr.mxu0 0.0
        %1889 = vmatpush1.msra.mxu0 0.0
        %1890 = vmatprep.subr.mxu0 0.0
        %1891 = vmatpush1.msra.mxu0 0.0
        %1892 = vmatprep.subr.mxu0 0.0
        %1893 = vmatpush1.msra.mxu0 0.0
        %1894 = vmatprep.subr.mxu0 0.0
        %1895 = vmatpush1.msra.mxu0 0.0
        %1896 = vmatprep.subr.mxu0 0.0
        %1897 = vmatpush1.msra.mxu0 0.0
        %1898 = vmatprep.subr.mxu0 0.0
        %1899 = vmatpush1.msra.mxu0 0.0
        %1900 = vmatprep.subr.mxu0 0.0
        %1901 = vmatpush1.msra.mxu0 0.0
        %1902 = vmatprep.subr.mxu0 0.0
        %1903 = vmatpush1.msra.mxu0 0.0
        %1904 = vmatprep.subr.mxu0 0.0
        %1905 = vmatpush1.msra.mxu0 0.0
        %1906 = vmatprep.subr.mxu0 0.0
        %1907 = vmatpush1.msra.mxu0 0.0
        %1908 = vmatprep.subr.mxu0 0.0
        %1909 = vmatpush1.msra.mxu0 0.0
        %1910 = vmatprep.subr.mxu0 0.0
        %1911 = vmatpush2.msra.mxu0 0.0
        %1912 = vmatprep.subr.mxu0 0.0
        %1913 = vmatpush2.msra.mxu0 0.0
        %1914 = vmatprep.subr.mxu0 0.0
        %1915 = vmatpush2.msra.mxu0 0.0
        %1916 = vmatprep.subr.mxu0 0.0
        %1917 = vmatpush2.msra.mxu0 0.0
        %1918 = vmatprep.subr.mxu0 0.0
        %1919 = vmatpush2.msra.mxu0 0.0
        %1920 = vmatprep.subr.mxu0 0.0
        %1921 = vmatpush2.msra.mxu0 0.0
        %1922 = vmatprep.subr.mxu0 0.0
        %1923 = vmatpush2.msra.mxu0 0.0
        %1924 = vmatprep.subr.mxu0 0.0
        %1925 = vmatpush2.msra.mxu0 0.0
        %1926 = vmatprep.subr.mxu0 0.0
        %1927 = vmatpush2.msra.mxu0 0.0
        %1928 = vmatprep.subr.mxu0 0.0
        %1929 = vmatpush2.msra.mxu0 0.0
        %1930 = vmatprep.subr.mxu0 0.0
        %1931 = vmatpush2.msra.mxu0 0.0
        %1932 = vmatprep.subr.mxu0 0.0
        %1933 = vmatpush2.msra.mxu0 0.0
        %1934 = vmatprep.subr.mxu0 0.0
        %1935 = vmatpush2.msra.mxu0 0.0
        %1936 = vmatprep.subr.mxu0 0.0
        %1937 = vmatpush2.msra.mxu0 0.0
        %1938 = vmatprep.subr.mxu0 0.0
        %1939 = vmatpush2.msra.mxu0 0.0
        %1940 = vmatprep.subr.mxu0 0.0
        %1941 = vmatpush2.msra.mxu0 0.0
        %1942 = vmatprep.mubr.f32.mxu0 0.0
        %v1943 = vand.u32 %v1153, 4294901760
        %1944 = vmatmul.mubr.f32.gmra.mxu0 %v1943
        %v1945 = vpop.f32.mrf.mxu0
        %v1946 = vadd.f32 %v1875, %v1945
        %v1947 = vpop.f32.mrf.mxu0
        %1948 = vdwg.mxu0
        %1949 = vmatprep.subr.mxu0 0.0
        %1950 = vmatpush1.msra.mxu0 1.0
        %1951 = vmatprep.subr.mxu0 0.0
        %1952 = vmatpush1.msra.mxu0 1.0
        %1953 = vmatprep.subr.mxu0 0.0
        %1954 = vmatpush1.msra.mxu0 1.0
        %1955 = vmatprep.subr.mxu0 0.0
        %1956 = vmatpush1.msra.mxu0 1.0
        %1957 = vmatprep.subr.mxu0 0.0
        %1958 = vmatpush1.msra.mxu0 1.0
        %1959 = vmatprep.subr.mxu0 0.0
        %1960 = vmatpush1.msra.mxu0 1.0
        %1961 = vmatprep.subr.mxu0 0.0
        %1962 = vmatpush1.msra.mxu0 1.0
        %1963 = vmatprep.subr.mxu0 0.0
        %1964 = vmatpush1.msra.mxu0 1.0
        %1965 = vmatprep.subr.mxu0 0.0
        %1966 = vmatpush1.msra.mxu0 1.0
        %1967 = vmatprep.subr.mxu0 0.0
        %1968 = vmatpush1.msra.mxu0 1.0
        %1969 = vmatprep.subr.mxu0 0.0
        %1970 = vmatpush1.msra.mxu0 1.0
        %1971 = vmatprep.subr.mxu0 0.0
        %1972 = vmatpush1.msra.mxu0 1.0
        %1973 = vmatprep.subr.mxu0 0.0
        %1974 = vmatpush1.msra.mxu0 1.0
        %1975 = vmatprep.subr.mxu0 0.0
        %1976 = vmatpush1.msra.mxu0 1.0
        %1977 = vmatprep.subr.mxu0 0.0
        %1978 = vmatpush1.msra.mxu0 1.0
        %1979 = vmatprep.subr.mxu0 0.0
        %1980 = vmatpush1.msra.mxu0 1.0
        %1981 = vmatprep.subr.mxu0 0.0
        %1982 = vmatpush2.msra.mxu0 0.0
        %1983 = vmatprep.subr.mxu0 0.0
        %1984 = vmatpush2.msra.mxu0 0.0
        %1985 = vmatprep.subr.mxu0 0.0
        %1986 = vmatpush2.msra.mxu0 0.0
        %1987 = vmatprep.subr.mxu0 0.0
        %1988 = vmatpush2.msra.mxu0 0.0
        %1989 = vmatprep.subr.mxu0 0.0
        %1990 = vmatpush2.msra.mxu0 0.0
        %1991 = vmatprep.subr.mxu0 0.0
        %1992 = vmatpush2.msra.mxu0 0.0
        %1993 = vmatprep.subr.mxu0 0.0
        %1994 = vmatpush2.msra.mxu0 0.0
        %1995 = vmatprep.subr.mxu0 0.0
        %1996 = vmatpush2.msra.mxu0 0.0
        %1997 = vmatprep.subr.mxu0 0.0
        %1998 = vmatpush2.msra.mxu0 0.0
        %1999 = vmatprep.subr.mxu0 0.0
        %2000 = vmatpush2.msra.mxu0 0.0
        %2001 = vmatprep.subr.mxu0 0.0
        %2002 = vmatpush2.msra.mxu0 0.0
        %2003 = vmatprep.subr.mxu0 0.0
        %2004 = vmatpush2.msra.mxu0 0.0
        %2005 = vmatprep.subr.mxu0 0.0
        %2006 = vmatpush2.msra.mxu0 0.0
        %2007 = vmatprep.subr.mxu0 0.0
        %2008 = vmatpush2.msra.mxu0 0.0
        %2009 = vmatprep.subr.mxu0 0.0
        %2010 = vmatpush2.msra.mxu0 0.0
        %2011 = vmatprep.subr.mxu0 0.0
        %2012 = vmatpush2.msra.mxu0 0.0
        %2013 = vmatprep.mubr.f32.mxu0 0.0
        %v2014 = vand.u32 %v1153, 4294901760
        %2015 = vmatmul.mubr.f32.gmra.mxu0 %v2014
        %v2016 = vpop.f32.mrf.mxu0
        %v2017 = vadd.f32 %v1946, %v2016
        %v2018 = vpop.f32.mrf.mxu0
        %2019 = vdwg.mxu0
        %v2020 = vlog2.pop %v1584
        %v2021 = vmul.f32 %v2020, 0.6931472
        %v2022 = vadd.f32 %v2021, -0.8095017
        %v2023 = vsub.f32 %v2022, %v2017
        %v2024 = vadd.f32 %v1141, %v2023
        %v2025 = vadd.f32 %v257, %v2024
        %vm2026 = vcmask 7168
        %2027 = vst.msk [vmem:[#allocation2] sm:$0xff] %vm2026, %v2025
        // Predicated region
        $region41: #{tpu_custom_call.1} parent=31 // pred_check
          %p2028 = pneg %p250
        $region42: #{tpu_custom_call.1} parent=31 // pred_check_branch
          %2030 = sbr.rel (%p2028) target = $region44
        $region43: #{tpu_custom_call.1} parent=31 // pred_region
          %v2031 = vld [vmem:[#allocation2] sm:$0xff]
          %v2032 = vsel %vm2026, %v2031, 0.0
          %2033 = vadd.xlane.f32.xlu0 %v2032
          %v2034 = vpop.xlane.xlu0 %2033
          %v2035 = vrot.slane %v2034, 4
          %v2036 = vadd.f32 %v2034, %v2035
          %v2037 = vrot.slane %v2036, 2
          %v2038 = vadd.f32 %v2036, %v2037
          %v2039 = vrot.slane %v2038, 1
          %v2040 = vadd.f32 %v2038, %v2039
          %s2041 = vtos %v2040
          %v2042 = vstv %s2041
          %2043 = vst [vmem:[%s236] sm:$0xff] %v2042
        $region44: #{tpu_custom_call.1} parent=31 // pred_fallthru
          _
        %s2044 = sand.u32 %s124, 1
        %s2045 = scalar_lea.sflag [#allocation5], %s2044
        %s2046 = sand.u32 %s124, 1
        %s2047 = smul.addr %s2046, 8
        %s2048 = scalar_lea.vmem [#allocation6], %s2047
        // Predicated region
        $region45: #{tpu_custom_call.1} parent=31 // pred_check
          %p2049 = pneg %p134
        $region46: #{tpu_custom_call.1} parent=31 // pred_check_branch
          %2051 = sbr.rel (%p2049) target = $region48
        $region47: #{tpu_custom_call.1} parent=31 // pred_region
          %s2053 = ssub.s32 128, 128
          %2054 = vsyncadd %s2045, %s2053
          %s2055 = smul.addr %s24, 128
          %s2056 = scalar_lea.hbm %s3, %s2055
          %s2058 = sshll.u32 %s2048, 4
          %s2059 = int_to_ptr.vmem [resolvable:$true] %s2058
          %2061 = dma.vmem_to_hbm [thread:$0]  %s2059, 128, %s2056, %s2045
        $region48: #{tpu_custom_call.1} parent=31 // pred_fallthru
          _
      $region32: #{tpu_custom_call.1} parent=5 // pred_fallthru
        _
      %p2062 = scmp.le.s32.totalorder 2, %s15
      // Predicated region
      $region49: #{tpu_custom_call.1} parent=5 // pred_check
        %p2063 = pneg %p2062
      $region50: #{tpu_custom_call.1} parent=5 // pred_check_branch
        %2065 = sbr.rel (%p2063) target = $region52
      $region51: #{tpu_custom_call.1} parent=5 // pred_region
        %s2066 = ssub.s32 %s15, 2
        // Predicated region
        $region53: #{tpu_custom_call.1} parent=51 // pred_check
          %p2067 = pneg %p140
        $region54: #{tpu_custom_call.1} parent=51 // pred_check_branch
          %2069 = sbr.rel (%p2067) target = $region56
        $region55: #{tpu_custom_call.1} parent=51 // pred_region
          %s2070 = sand.u32 %s125, 1
          %s2071 = scalar_lea.sflag [#allocation5], %s2070
          %s2072 = sand.u32 %s125, 1
          %s2073 = smul.addr %s2072, 8
          %s2074 = scalar_lea.vmem [#allocation6], %s2073
          %2075 = dma.done %s2071, 128
        $region56: #{tpu_custom_call.1} parent=51 // pred_fallthru
          _
      $region52: #{tpu_custom_call.1} parent=5 // pred_fallthru
        _
    $region6: #{tpu_custom_call.1} parent=1 // loop_footer
      %s19 = sadd.s32 1, %s15
    $region7: #{tpu_custom_call.1} parent=1 // loop_footer_branch
      %14 = sbr.rel target = $region3
    $region8: #{tpu_custom_call.1} parent=1 // loop_exit
      _
    %2076 = vsyncpa [#allocation4], 1
    %s2077 = scalar_lea.sflag [#allocation4], 1
    %2078 = vsyncpa %s2077, 1
    %2079 = vsyncpa [#allocation5], 1
    %s2080 = scalar_lea.sflag [#allocation5], 1
    %2081 = vsyncpa %s2080, 1

</llo_original>
